<compile_context>
chip_gen: v6e
topology: v6e:2x2x1
jax: 0.10.0
libtpu: 0.0.40
codegen_flags: <defaults>
</compile_context>

<pallas_src>
import functools
import math

import jax
import jax.numpy as jnp
from jax import lax
from jax.experimental import pallas as pl
from jax.experimental.pallas import tpu as pltpu

_TK_MAX = 2048   # max K-block (bf16, keeps x/W tiles small enough for all generations)
_TM_MAX = 512    # max M tile (bounds pad-row waste and VMEM)
_TN_BIG = 512    # N tile when Dout is large and W doesn't fit comfortably in VMEM
_W_VMEM_SINGLE_TILE_BYTES = 4 << 20   # if padded W^T <= this, use a single N tile


def _round_up(a: int, b: int) -> int:
    return (a + b - 1) // b * b


def _cdiv(a: int, b: int) -> int:
    return (a + b - 1) // b


# ---------------------------------------------------------------------------
# Pallas kernel: GEMM (bf16 operands, f32 acc over K grid axis)
#                + per-channel scale/shift (folded bias + eval BN) + PReLU
# ---------------------------------------------------------------------------
def _dense_bn_prelu_kernel(x_ref, w_ref, scale_ref, shift_ref, alpha_ref,
                           o_ref, acc_ref):
    # x_ref:     (TM, TK)  bf16 activation tile
    # w_ref:     (TK, TN)  bf16 weight tile (W^T, zero padded)
    # scale_ref: (1,  TN)  f32  gamma / sqrt(var + eps)
    # shift_ref: (1,  TN)  f32  (bias - mean) * scale + beta
    # alpha_ref: (1,  TN)  f32  PReLU slope (broadcast scalar or per-channel)
    # o_ref:     (TM, TN)  output tile
    # acc_ref:   (TM, TN)  f32  accumulator scratch (resident across the K axis)
    k = pl.program_id(2)

    @pl.when(k == 0)
    def _():
        acc_ref[...] = jnp.zeros_like(acc_ref)

    acc_ref[...] += jnp.dot(x_ref[...], w_ref[...],
                            preferred_element_type=jnp.float32)

    @pl.when(k == pl.num_programs(2) - 1)
    def _():
        y = acc_ref[...] * scale_ref[...] + shift_ref[...]
        o_ref[...] = jnp.where(y >= 0.0, y, alpha_ref[...] * y).astype(o_ref.dtype)


def _fused_dense_bn_prelu(x_p, w_p, scale_p, shift_p, alpha_p,
                          *, tm, tn, tk, out_dtype):
    Mp, Kp = x_p.shape
    Np = w_p.shape[1]
    grid = (Mp // tm, Np // tn, Kp // tk)
    out_bytes = jnp.dtype(out_dtype).itemsize

    # Double-buffered inputs/outputs + single-buffer f32 accumulator + channel vectors.
    vmem_need = (2 * tm * tk * 2        # x tiles (bf16)
                 + 2 * tk * tn * 2      # W tiles (bf16)
                 + 2 * tm * tn * out_bytes
                 + tm * tn * 4          # accumulator scratch
                 + 2 * 3 * tn * 4)      # scale/shift/alpha
    vmem_limit = int(min(max(2 * vmem_need, 32 << 20), 56 << 20))  # < v7x 64 MiB physical

    cost = pl.CostEstimate(
        flops=2 * Mp * Kp * Np,
        transcendentals=0,
        bytes_accessed=(x_p.size * 2
                        + (Mp // tm) * w_p.size * 2
                        + (scale_p.size + shift_p.size + alpha_p.size) * 4
                        + Mp * Np * out_bytes),
    )

    return pl.pallas_call(
        _dense_bn_prelu_kernel,
        out_shape=jax.ShapeDtypeStruct((Mp, Np), out_dtype),
        grid=grid,
        in_specs=[
            pl.BlockSpec((tm, tk), lambda i, j, k: (i, k)),
            pl.BlockSpec((tk, tn), lambda i, j, k: (k, j)),
            pl.BlockSpec((1, tn), lambda i, j, k: (0, j)),
            pl.BlockSpec((1, tn), lambda i, j, k: (0, j)),
            pl.BlockSpec((1, tn), lambda i, j, k: (0, j)),
        ],
        out_specs=pl.BlockSpec((tm, tn), lambda i, j, k: (i, j)),
        scratch_shapes=[pltpu.VMEM((tm, tn), jnp.float32)],
        compiler_params=pltpu.CompilerParams(
            dimension_semantics=("parallel", "parallel", "arbitrary"),
            vmem_limit_bytes=vmem_limit,
        ),
        cost_estimate=cost,
    )(x_p, w_p, scale_p, shift_p, alpha_p)


# ---------------------------------------------------------------------------
# One-time parameter preparation (hoisted out of the per-call forward)
# ---------------------------------------------------------------------------
def prepare_dense_block_params(weight, bias, gamma, beta, running_mean,
                               running_var, alpha, *, eps=1e-5):
    """Fold Linear bias + eval-mode BN into per-channel scale/shift, pad and
    bf16-cast the weights, and broadcast the PReLU slope.  Call once per layer.

    weight: (Dout, Din) PyTorch Linear layout.  alpha: shape (1,) or (Dout,).
    Returns (w_p, scale_p, shift_p, alpha_p, Dout).
    """
    Dout, Din = weight.shape
    Kp = _round_up(Din, 128) if Din <= _TK_MAX else _round_up(Din, _TK_MAX)
    Np = _round_up(Dout, 128) if Dout <= _TN_BIG else _round_up(Dout, _TN_BIG)

    inv_std = lax.rsqrt(running_var.astype(jnp.float32) + eps)
    scale = gamma.astype(jnp.float32) * inv_std                              # (Dout,)
    shift = (bias.astype(jnp.float32)
             - running_mean.astype(jnp.float32)) * scale + beta.astype(jnp.float32)
    alpha_vec = jnp.broadcast_to(alpha.astype(jnp.float32).reshape(-1), (Dout,))

    w_p = jnp.zeros((Kp, Np), jnp.bfloat16).at[:Din, :Dout].set(
        weight.T.astype(jnp.bfloat16))
    scale_p = jnp.zeros((1, Np), jnp.float32).at[0, :Dout].set(scale)
    shift_p = jnp.zeros((1, Np), jnp.float32).at[0, :Dout].set(shift)
    alpha_p = jnp.zeros((1, Np), jnp.float32).at[0, :Dout].set(alpha_vec)
    return w_p, scale_p, shift_p, alpha_p, Dout


# ---------------------------------------------------------------------------
# DenseBlock forward (norm='batch' in eval mode, activation='prelu', bias=True)
# ---------------------------------------------------------------------------
@functools.partial(jax.jit, static_argnames=("dout", "out_dtype"))
def dense_block_apply(x, w_p, scale_p, shift_p, alpha_p, *, dout,
                      out_dtype=jnp.float32):
    """x: (B, Din) f32.  Prepared params from prepare_dense_block_params.
    Returns (B, dout) in out_dtype."""
    B, Din = x.shape
    Kp, Np = w_p.shape

    # --- tile selection (generation-portable VMEM budget, bounded M padding) ---
    tk = Kp if Kp <= _TK_MAX else _TK_MAX
    if Np <= _TN_BIG or Kp * Np * 2 <= _W_VMEM_SINGLE_TILE_BYTES:
        tn = Np                       # single N tile: W^T streamed once per M tile
    else:
        tn = _TN_BIG
    n_m = max(1, _cdiv(B, _TM_MAX))
    tm = _round_up(_cdiv(B, n_m), 8)
    Mp = n_m * tm
    # v7x has 2 TensorCores: if the grid would collapse to one program, split N in two.
    if n_m == 1 and Np // tn == 1 and Np >= 256 and (Np // 2) % 128 == 0:
        tn = Np // 2

    # --- only x padding / cast remains per call ---
    x_p = jnp.zeros((Mp, Kp), jnp.bfloat16).at[:B, :Din].set(x.astype(jnp.bfloat16))

    out_p = _fused_dense_bn_prelu(x_p, w_p, scale_p, shift_p, alpha_p,
                                  tm=tm, tn=tn, tk=tk, out_dtype=out_dtype)
    return out_p[:B, :dout]


def dense_block_forward(x, weight, bias, gamma, beta, running_mean, running_var,
                        alpha, *, eps=1e-5, out_dtype=jnp.float32):
    """Convenience wrapper: prep + apply in one call (prep should be hoisted in real use)."""
    w_p, scale_p, shift_p, alpha_p, dout = prepare_dense_block_params(
        weight, bias, gamma, beta, running_mean, running_var, alpha, eps=eps)
    return dense_block_apply(x, w_p, scale_p, shift_p, alpha_p,
                             dout=dout, out_dtype=out_dtype)


# ---------------------------------------------------------------------------
# Reference (plain JAX, same bf16-operand / f32-accumulate precision)
# ---------------------------------------------------------------------------
def dense_block_reference(x, weight, bias, gamma, beta, running_mean, running_var,
                          alpha, *, eps=1e-5):
    z = jnp.dot(x.astype(jnp.bfloat16), weight.astype(jnp.bfloat16).T,
                preferred_element_type=jnp.float32) + bias
    y = (z - running_mean) / jnp.sqrt(running_var + eps) * gamma + beta
    return jnp.where(y >= 0.0, y, alpha.reshape(-1)[0] * y)


def _make_inputs(key, B, Din, Dout):
    kx, kw, kb, kg, kbe, km, kv = jax.random.split(key, 7)
    x = jax.random.normal(kx, (B, Din), dtype=jnp.float32)
    weight = jax.random.normal(kw, (Dout, Din), dtype=jnp.float32) / math.sqrt(Din)
    bias = jax.random.normal(kb, (Dout,), dtype=jnp.float32) * 0.1
    gamma = 1.0 + 0.1 * jax.random.normal(kg, (Dout,), dtype=jnp.float32)
    beta = 0.1 * jax.random.normal(kbe, (Dout,), dtype=jnp.float32)
    running_mean = 0.1 * jax.random.normal(km, (Dout,), dtype=jnp.float32)
    running_var = jax.random.uniform(kv, (Dout,), dtype=jnp.float32,
                                     minval=0.5, maxval=1.5)
    alpha = jnp.array([0.25], dtype=jnp.float32)   # PReLU default init (scalar)
    return x, weight, bias, gamma, beta, running_mean, running_var, alpha


if __name__ == "__main__":
    key = jax.random.PRNGKey(0)
    k1, k2 = jax.random.split(key)

    # Case 1: exercises M/K/N padding and the split-N grid (Np=256 -> grid (1, 2, 1)).
    args1 = _make_inputs(k1, B=300, Din=96, Dout=160)
    out1 = jax.block_until_ready(dense_block_forward(*args1))
    ref1 = jax.block_until_ready(dense_block_reference(*args1))
    assert out1.shape == (300, 160), out1.shape
    err1 = float(jnp.max(jnp.abs(out1 - ref1)))
    assert jnp.allclose(out1, ref1, atol=2e-4, rtol=2e-4), err1

    # Case 2: Din > TK_MAX exercises the K grid axis / accumulator path (grid (1, 1, 2)).
    args2 = _make_inputs(k2, B=64, Din=2500, Dout=96)
    out2 = jax.block_until_ready(dense_block_forward(*args2))
    ref2 = jax.block_until_ready(dense_block_reference(*args2))
    assert out2.shape == (64, 96), out2.shape
    err2 = float(jnp.max(jnp.abs(out2 - ref2)))
    assert jnp.allclose(out2, ref2, atol=2e-3, rtol=2e-3), err2

    print("KERNEL_OK")
</pallas_src>

<mosaic_0001>
module attributes {stable_mosaic.version = 11 : i64} {
  func.func @_dense_bn_prelu_kernel(%arg0: i32, %arg1: i32, %arg2: i32, %arg3: memref<304x128xbf16, #tpu.memory_space<vmem>>, %arg4: memref<128x128xbf16, #tpu.memory_space<vmem>>, %arg5: memref<1x128xf32, #tpu.memory_space<vmem>>, %arg6: memref<1x128xf32, #tpu.memory_space<vmem>>, %arg7: memref<1x128xf32, #tpu.memory_space<vmem>>, %arg8: memref<304x128xf32, #tpu.memory_space<vmem>>, %arg9: memref<304x128xf32, #tpu.memory_space<vmem>>) attributes {dimension_semantics = [#tpu.dimension_semantics<parallel>, #tpu.dimension_semantics<parallel>, #tpu.dimension_semantics<arbitrary>], iteration_bounds = array<i64: 1, 2, 1>, scalar_prefetch = 0 : i64, scratch_operands = 1 : i64, tpu.core_type = #tpu.core_type<tc>, window_params = [{transform_indices = @transform_0, window_bounds = array<i64: 304, 128>}, {transform_indices = @transform_1, window_bounds = array<i64: 128, 128>}, {transform_indices = @transform_2, window_bounds = array<i64: 1, 128>}, {transform_indices = @transform_3, window_bounds = array<i64: 1, 128>}, {transform_indices = @transform_4, window_bounds = array<i64: 1, 128>}, {transform_indices = @transform_5, window_bounds = array<i64: 304, 128>}]} {
    %c0_i32 = arith.constant 0 : i32
    %0 = arith.cmpi eq, %arg2, %c0_i32 : i32
    %1 = arith.extui %0 : i1 to i32
    %c0_i32_0 = arith.constant 0 : i32
    %2 = arith.cmpi ne, %1, %c0_i32_0 : i32
    scf.if %2 {
      %cst_10 = arith.constant 0.000000e+00 : f32
      %12 = vector.broadcast %cst_10 : f32 to vector<304x128xf32>
      %c0_11 = arith.constant 0 : index
      %c0_12 = arith.constant 0 : index
      %13 = vector.load %arg9[%c0_11, %c0_12] : memref<304x128xf32, #tpu.memory_space<vmem>>, vector<304x128xf32>
      tpu.vector_store %arg9[%c0_11, %c0_12], %12 {strides = array<i32>} : memref<304x128xf32, #tpu.memory_space<vmem>>, vector<304x128xf32>,
    } else {
    }
    %c0 = arith.constant 0 : index
    %c0_1 = arith.constant 0 : index
    %3 = vector.load %arg9[%c0, %c0_1] : memref<304x128xf32, #tpu.memory_space<vmem>>, vector<304x128xf32>
    %c0_2 = arith.constant 0 : index
    %c0_3 = arith.constant 0 : index
    %4 = vector.load %arg3[%c0_2, %c0_3] : memref<304x128xbf16, #tpu.memory_space<vmem>>, vector<304x128xbf16>
    %c0_4 = arith.constant 0 : index
    %c0_5 = arith.constant 0 : index
    %5 = vector.load %arg4[%c0_4, %c0_5] : memref<128x128xbf16, #tpu.memory_space<vmem>>, vector<128x128xbf16>
    %cst = arith.constant dense<0.000000e+00> : vector<304x128xf32>
    %6 = tpu.matmul %4, %5, %cst {dimension_numbers = #tpu.dot_dimension_numbers<[1], [0], [0], [1], [0, 0, 1, 1], [], []>} : vector<304x128xbf16>, vector<128x128xbf16>, vector<304x128xf32> -> vector<304x128xf32>
    %7 = arith.addf %3, %6 : vector<304x128xf32>
    %c0_6 = arith.constant 0 : index
    %c0_7 = arith.constant 0 : index
    %8 = vector.load %arg9[%c0_6, %c0_7] : memref<304x128xf32, #tpu.memory_space<vmem>>, vector<304x128xf32>
    tpu.vector_store %arg9[%c0_6, %c0_7], %7 {strides = array<i32>} : memref<304x128xf32, #tpu.memory_space<vmem>>, vector<304x128xf32>,
    %c0_i32_8 = arith.constant 0 : i32
    %9 = arith.cmpi eq, %arg2, %c0_i32_8 : i32
    %10 = arith.extui %9 : i1 to i32
    %c0_i32_9 = arith.constant 0 : i32
    %11 = arith.cmpi ne, %10, %c0_i32_9 : i32
    scf.if %11 {
      %c0_10 = arith.constant 0 : index
      %c0_11 = arith.constant 0 : index
      %12 = vector.load %arg9[%c0_10, %c0_11] : memref<304x128xf32, #tpu.memory_space<vmem>>, vector<304x128xf32>
      %c0_12 = arith.constant 0 : index
      %c0_13 = arith.constant 0 : index
      %13 = vector.load %arg5[%c0_12, %c0_13] : memref<1x128xf32, #tpu.memory_space<vmem>>, vector<1x128xf32>
      %14 = vector.broadcast %13 : vector<1x128xf32> to vector<304x128xf32>
      %15 = arith.mulf %12, %14 : vector<304x128xf32>
      %c0_14 = arith.constant 0 : index
      %c0_15 = arith.constant 0 : index
      %16 = vector.load %arg6[%c0_14, %c0_15] : memref<1x128xf32, #tpu.memory_space<vmem>>, vector<1x128xf32>
      %17 = vector.broadcast %16 : vector<1x128xf32> to vector<304x128xf32>
      %18 = arith.addf %15, %17 : vector<304x128xf32>
      %cst_16 = arith.constant 0.000000e+00 : f32
      %19 = vector.broadcast %cst_16 : f32 to vector<304x128xf32>
      %20 = arith.cmpf oge, %18, %19 : vector<304x128xf32>
      %c0_17 = arith.constant 0 : index
      %c0_18 = arith.constant 0 : index
      %21 = vector.load %arg7[%c0_17, %c0_18] : memref<1x128xf32, #tpu.memory_space<vmem>>, vector<1x128xf32>
      %22 = vector.broadcast %21 : vector<1x128xf32> to vector<304x128xf32>
      %23 = arith.mulf %22, %18 : vector<304x128xf32>
      %24 = arith.select %20, %18, %23 : vector<304x128xi1>, vector<304x128xf32>
      %c0_19 = arith.constant 0 : index
      %c0_20 = arith.constant 0 : index
      %25 = vector.load %arg8[%c0_19, %c0_20] : memref<304x128xf32, #tpu.memory_space<vmem>>, vector<304x128xf32>
      tpu.vector_store %arg8[%c0_19, %c0_20], %24 {strides = array<i32>} : memref<304x128xf32, #tpu.memory_space<vmem>>, vector<304x128xf32>,
    } else {
    }
    return
  }
  func.func @transform_0(%arg0: i32, %arg1: i32, %arg2: i32) -> (i32, i32) {
    %c0_i32 = arith.constant 0 : i32
    return %arg0, %arg2 : i32, i32
  }
  func.func @transform_1(%arg0: i32, %arg1: i32, %arg2: i32) -> (i32, i32) {
    %c0_i32 = arith.constant 0 : i32
    return %arg2, %arg1 : i32, i32
  }
  func.func @transform_2(%arg0: i32, %arg1: i32, %arg2: i32) -> (i32, i32) {
    %c0_i32 = arith.constant 0 : i32
    %c0_i32_0 = arith.constant 0 : i32
    return %c0_i32, %arg1 : i32, i32
  }
  func.func @transform_3(%arg0: i32, %arg1: i32, %arg2: i32) -> (i32, i32) {
    %c0_i32 = arith.constant 0 : i32
    %c0_i32_0 = arith.constant 0 : i32
    return %c0_i32, %arg1 : i32, i32
  }
  func.func @transform_4(%arg0: i32, %arg1: i32, %arg2: i32) -> (i32, i32) {
    %c0_i32 = arith.constant 0 : i32
    %c0_i32_0 = arith.constant 0 : i32
    return %c0_i32, %arg1 : i32, i32
  }
  func.func @transform_5(%arg0: i32, %arg1: i32, %arg2: i32) -> (i32, i32) {
    %c0_i32 = arith.constant 0 : i32
    return %arg0, %arg1 : i32, i32
  }
}

</mosaic_0001>

<llo_original>
// kernel: dense_block_apply.1
$region0: #{dense_block_apply.1}
  #allocation0 [shape = 'u32[]', space=smem, size = 0x4, offset = 0x4, fixed_abs, tag = 'smem constant byte address 0x4 - core index']
  #allocation1 [shape = 'u32[144,128]{1,0:T(1,128)}', space=vmem, size = 0x12000, scoped, tag = 'internal scratch']
  #allocation2 [shape = 'f32[304,128]{1,0:T(8,128)}', space=vmem, size = 0x26000, scoped, tag = 'scratch operand']
  %s0 = inlined_call_operand.vmem [shape: bf16[304,128], index: 0, kind: input, shape index: {}]
  %s1 = inlined_call_operand.vmem [shape: bf16[128,256], index: 1, kind: input, shape index: {}]
  %s2 = inlined_call_operand.vmem [shape: f32[1,256], index: 2, kind: input, shape index: {}]
  %s3 = inlined_call_operand.vmem [shape: f32[1,256], index: 3, kind: input, shape index: {}]
  %s4 = inlined_call_operand.vmem [shape: f32[1,256], index: 4, kind: input, shape index: {}]
  %s5 = inlined_call_operand.vmem [shape: f32[304,256], index: 5, kind: output, shape index: {}]
  %s6 = sld [smem:[#allocation0]]
  $region136: #{dense_block_apply.1} parent=0
    _
  %s8 = ssub.s32 1, %s6
  %s9 = scalar_select 0, %s8, %s6
  $region1: #{dense_block_apply.1} parent=0
    #allocation3 [shape = 'u8[65536]{0}', space=vmem, size = 0x10000, scoped, tag = 'input window, operand 1']
    #allocation4 [shape = 'u8[311296]{0}', space=vmem, size = 0x4c000, scoped, tag = 'output window, operand 0']
    loop: start=0, step=1, limit=4
    $region2: #{dense_block_apply.1} parent=1 // loop_pre_header
      _
    $region3: #{dense_block_apply.1} parent=1 // loop_header
      %s11 = sphi 0, %s15
      %p12 = scmp.ge.s32.totalorder %s11, 4
      %s18 = sphi 0, %s37
      %s19 = sphi 0, %s33
      %s20 = sphi 0, %s29
      %s21 = sphi 0, %s18
      %s22 = sphi 0, %s19
      %s23 = sphi 0, %s20
      %s24 = sphi 0, %s21
      %s25 = sphi 0, %s22
      %s26 = sphi 0, %s23
      %s42 = sphi 0, %s44
      %s45 = sphi 0, %s42
      %s46 = sphi 0, %s45
      %s62 = sphi 0, %s46
      %s70 = sphi 0, %s72
      %s73 = sphi 0, %s70
      %s74 = sphi 0, %s73
      %s90 = sphi 0, %s74
      %s96 = sphi 0, %s98
      %s99 = sphi 0, %s96
      %s100 = sphi 0, %s99
      %s116 = sphi 0, %s100
      %s122 = sphi 0, %s124
      %s125 = sphi 0, %s122
      %s126 = sphi 0, %s125
      %s142 = sphi 0, %s126
      %s148 = sphi 0, %s150
      %s151 = sphi 0, %s148
      %s152 = sphi 0, %s151
      %s168 = sphi 0, %s152
      %s176 = sphi 0, %s178
      %s179 = sphi 0, %s176
      %s180 = sphi 0, %s179
      %s196 = sphi 0, %s180
    $region4: #{dense_block_apply.1} parent=1 // loop_header_branch
      %14 = sbr.rel (%p12) target = $region8
    $region5: #{dense_block_apply.1} parent=1 // loop_body
      %s16 = ssub.s32 %s11, 1
      %s17 = ssub.s32 %s11, 2
      %s27 = sadd.s32 1, %s20
      %p28 = scmp.ge.s32.totalorder %s27, 1
      %s29 = scalar_select %p28, 0, %s27
      %s30 = sadd.s32 1, %s19
      %s31 = scalar_select %p28, %s30, %s19
      %p32 = scmp.ge.s32.totalorder %s31, 2
      %s33 = scalar_select %p32, 0, %s31
      %s34 = sadd.s32 1, %s18
      %s35 = scalar_select %p32, %s34, %s18
      %p36 = scmp.ge.s32.totalorder %s35, 1
      %s37 = scalar_select %p36, 0, %s35
      %s38 = ssub.s32 %s18, %s37
      %s39 = ssub.s32 %s20, %s29
      %s40 = sor.u32 %s38, %s39
      %p41 = scmp.eq.s32.totalorder %s40, 0
      %s43 = sadd.s32 %s42, 1
      %s44 = scalar_select %p41, %s42, %s43
      %p47 = pneg %p41
      %p48 = scmp.eq.s32.totalorder %s11, 1
      %p49 = por %p47, %p48
      %p50 = scmp.ne.s32.totalorder %s42, %s45
      %p51 = scmp.eq.s32.totalorder %s11, 0
      %p52 = por %p50, %p51
      %p53 = scmp.ne.s32.totalorder %s42, %s45
      %p54 = scmp.eq.s32.totalorder %s16, 1
      %p55 = por %p53, %p54
      %p56 = scmp.ne.s32.totalorder %s45, %s46
      %p57 = scmp.eq.s32.totalorder %s16, 0
      %p58 = por %p56, %p57
      %p59 = scmp.ne.s32.totalorder %s45, %s46
      %p60 = scmp.eq.s32.totalorder %s17, 1
      %p61 = por %p59, %p60
      %p63 = scmp.ne.s32.totalorder %s46, %s62
      %p64 = scmp.eq.s32.totalorder %s17, 0
      %p65 = por %p63, %p64
      %s66 = ssub.s32 %s20, %s29
      %s67 = ssub.s32 %s19, %s33
      %s68 = sor.u32 %s66, %s67
      %p69 = scmp.eq.s32.totalorder %s68, 0
      %s71 = sadd.s32 %s70, 1
      %s72 = scalar_select %p69, %s70, %s71
      %p75 = pneg %p69
      %p76 = scmp.eq.s32.totalorder %s11, 1
      %p77 = por %p75, %p76
      %p78 = scmp.ne.s32.totalorder %s70, %s73
      %p79 = scmp.eq.s32.totalorder %s11, 0
      %p80 = por %p78, %p79
      %p81 = scmp.ne.s32.totalorder %s70, %s73
      %p82 = scmp.eq.s32.totalorder %s16, 1
      %p83 = por %p81, %p82
      %p84 = scmp.ne.s32.totalorder %s73, %s74
      %p85 = scmp.eq.s32.totalorder %s16, 0
      %p86 = por %p84, %p85
      %p87 = scmp.ne.s32.totalorder %s73, %s74
      %p88 = scmp.eq.s32.totalorder %s17, 1
      %p89 = por %p87, %p88
      %p91 = scmp.ne.s32.totalorder %s74, %s90
      %p92 = scmp.eq.s32.totalorder %s17, 0
      %p93 = por %p91, %p92
      %s94 = ssub.s32 %s19, %s33
      %p95 = scmp.eq.s32.totalorder %s94, 0
      %s97 = sadd.s32 %s96, 1
      %s98 = scalar_select %p95, %s96, %s97
      %p101 = pneg %p95
      %p102 = scmp.eq.s32.totalorder %s11, 1
      %p103 = por %p101, %p102
      %p104 = scmp.ne.s32.totalorder %s96, %s99
      %p105 = scmp.eq.s32.totalorder %s11, 0
      %p106 = por %p104, %p105
      %p107 = scmp.ne.s32.totalorder %s96, %s99
      %p108 = scmp.eq.s32.totalorder %s16, 1
      %p109 = por %p107, %p108
      %p110 = scmp.ne.s32.totalorder %s99, %s100
      %p111 = scmp.eq.s32.totalorder %s16, 0
      %p112 = por %p110, %p111
      %p113 = scmp.ne.s32.totalorder %s99, %s100
      %p114 = scmp.eq.s32.totalorder %s17, 1
      %p115 = por %p113, %p114
      %p117 = scmp.ne.s32.totalorder %s100, %s116
      %p118 = scmp.eq.s32.totalorder %s17, 0
      %p119 = por %p117, %p118
      %s120 = ssub.s32 %s19, %s33
      %p121 = scmp.eq.s32.totalorder %s120, 0
      %s123 = sadd.s32 %s122, 1
      %s124 = scalar_select %p121, %s122, %s123
      %p127 = pneg %p121
      %p128 = scmp.eq.s32.totalorder %s11, 1
      %p129 = por %p127, %p128
      %p130 = scmp.ne.s32.totalorder %s122, %s125
      %p131 = scmp.eq.s32.totalorder %s11, 0
      %p132 = por %p130, %p131
      %p133 = scmp.ne.s32.totalorder %s122, %s125
      %p134 = scmp.eq.s32.totalorder %s16, 1
      %p135 = por %p133, %p134
      %p136 = scmp.ne.s32.totalorder %s125, %s126
      %p137 = scmp.eq.s32.totalorder %s16, 0
      %p138 = por %p136, %p137
      %p139 = scmp.ne.s32.totalorder %s125, %s126
      %p140 = scmp.eq.s32.totalorder %s17, 1
      %p141 = por %p139, %p140
      %p143 = scmp.ne.s32.totalorder %s126, %s142
      %p144 = scmp.eq.s32.totalorder %s17, 0
      %p145 = por %p143, %p144
      %s146 = ssub.s32 %s19, %s33
      %p147 = scmp.eq.s32.totalorder %s146, 0
      %s149 = sadd.s32 %s148, 1
      %s150 = scalar_select %p147, %s148, %s149
      %p153 = pneg %p147
      %p154 = scmp.eq.s32.totalorder %s11, 1
      %p155 = por %p153, %p154
      %p156 = scmp.ne.s32.totalorder %s148, %s151
      %p157 = scmp.eq.s32.totalorder %s11, 0
      %p158 = por %p156, %p157
      %p159 = scmp.ne.s32.totalorder %s148, %s151
      %p160 = scmp.eq.s32.totalorder %s16, 1
      %p161 = por %p159, %p160
      %p162 = scmp.ne.s32.totalorder %s151, %s152
      %p163 = scmp.eq.s32.totalorder %s16, 0
      %p164 = por %p162, %p163
      %p165 = scmp.ne.s32.totalorder %s151, %s152
      %p166 = scmp.eq.s32.totalorder %s17, 1
      %p167 = por %p165, %p166
      %p169 = scmp.ne.s32.totalorder %s152, %s168
      %p170 = scmp.eq.s32.totalorder %s17, 0
      %p171 = por %p169, %p170
      %s172 = ssub.s32 %s18, %s37
      %s173 = ssub.s32 %s19, %s33
      %s174 = sor.u32 %s172, %s173
      %p175 = scmp.eq.s32.totalorder %s174, 0
      %s177 = sadd.s32 %s176, 1
      %s178 = scalar_select %p175, %s176, %s177
      %p181 = pneg %p175
      %p182 = scmp.eq.s32.totalorder %s11, 1
      %p183 = por %p181, %p182
      %p184 = scmp.ne.s32.totalorder %s176, %s179
      %p185 = scmp.eq.s32.totalorder %s11, 0
      %p186 = por %p184, %p185
      %p187 = scmp.ne.s32.totalorder %s176, %s179
      %p188 = scmp.eq.s32.totalorder %s16, 1
      %p189 = por %p187, %p188
      %p190 = scmp.ne.s32.totalorder %s179, %s180
      %p191 = scmp.eq.s32.totalorder %s16, 0
      %p192 = por %p190, %p191
      %p193 = scmp.ne.s32.totalorder %s179, %s180
      %p194 = scmp.eq.s32.totalorder %s17, 1
      %p195 = por %p193, %p194
      %p197 = scmp.ne.s32.totalorder %s180, %s196
      %p198 = scmp.eq.s32.totalorder %s17, 0
      %p199 = por %p197, %p198
      %p200 = scmp.le.s32.totalorder 1, %s11
      %p201 = scmp.lt.s32.totalorder %s11, 3
      %p202 = pnand %p200, %p201
      %p203 = pneg %p202
      // Predicated region
      $region9: #{dense_block_apply.1} parent=5 // pred_check
        _
      $region10: #{dense_block_apply.1} parent=5 // pred_check_branch
        %205 = sbr.rel (%p202) target = $region12
      $region11: #{dense_block_apply.1} parent=5 // pred_region
        %s206 = ssub.s32 %s11, 1
        // Predicated region
        $region13: #{dense_block_apply.1} parent=11 // pred_check
          %p207 = pneg %p58
        $region14: #{dense_block_apply.1} parent=11 // pred_check_branch
          %209 = sbr.rel (%p207) target = $region16
        $region15: #{dense_block_apply.1} parent=11 // pred_region
          %s210 = smul.u32 38, %s21
          %p211 = scmp.lt.s32.totalorder %s210, 37
          %s212 = scalar_select %p211, %s210, 37
          %p213 = scmp.lt.s32.totalorder %s23, 0
          %s214 = scalar_select %p213, %s23, 0
          %s215 = sadd.s32 %s214, %s212
          %s216 = smul.addr %s215, 4
          %s217 = scalar_lea.vmem %s0, %s216
          %s218 = smul.u32 38, %s21
        $region16: #{dense_block_apply.1} parent=11 // pred_fallthru
          _
      $region12: #{dense_block_apply.1} parent=5 // pred_fallthru
        _
      %p219 = scmp.lt.s32.totalorder %s11, 2
      // Predicated region
      $region17: #{dense_block_apply.1} parent=5 // pred_check
        %p220 = pneg %p219
      $region18: #{dense_block_apply.1} parent=5 // pred_check_branch
        %222 = sbr.rel (%p220) target = $region20
      $region19: #{dense_block_apply.1} parent=5 // pred_region
        // Predicated region
        $region21: #{dense_block_apply.1} parent=19 // pred_check
          %p223 = pneg %p80
        $region22: #{dense_block_apply.1} parent=19 // pred_check_branch
          %225 = sbr.rel (%p223) target = $region24
        $region23: #{dense_block_apply.1} parent=19 // pred_region
          %s226 = sand.u32 %s70, 1
          %s227 = sand.u32 %s70, 1
          %s228 = smul.addr %s227, 64
          %s229 = scalar_lea.vmem [#allocation3], %s228
          %s230 = smul.u32 16, %s20
          %s231 = smul.addr %s230, 2
          %s232 = sadd.s32 %s19, %s231
          %s233 = smul.addr %s232, 4
          %s234 = scalar_lea.vmem %s1, %s233
          // Predicated region
          $region25: #{dense_block_apply.1} parent=23 // pred_check
            _
          $region26: #{dense_block_apply.1} parent=23 // pred_check_branch
            %236 = sbr.rel (0) target = $region28
          $region27: #{dense_block_apply.1} parent=23 // pred_region
            // Predicated region
            $region29: #{dense_block_apply.1} parent=27 // pred_check
              _
            $region30: #{dense_block_apply.1} parent=27 // pred_check_branch
              %238 = sbr.rel target = $region32
            $region31: #{dense_block_apply.1} parent=27 // pred_region
              // Predicated region
              $region44: #{dense_block_apply.1} parent=31 // pred_check
                _
              $region45: #{dense_block_apply.1} parent=31 // pred_check_branch
                %284 = sbr.rel (0) target = $region47
              $region46: #{dense_block_apply.1} parent=31 // pred_region
                loop: start=0, step=1, limit=1
                $region48: #{dense_block_apply.1} parent=46 // loop_pre_header
                  _
                $region49: #{dense_block_apply.1} parent=46 // loop_header
                  %s286 = sphi 0, %s290
                  %p287 = scmp.ge.s32.totalorder %s286, 1
                  %s291 = sphi %s234, %s234
                  %s292 = sphi %s229, %s229
                $region50: #{dense_block_apply.1} parent=46 // loop_header_branch
                  %289 = sbr.rel (%p287) target = $region54
                $region51: #{dense_block_apply.1} parent=46 // loop_body
                  _
                $region52: #{dense_block_apply.1} parent=46 // loop_footer
                  %s290 = sadd.s32 1, %s286
                $region53: #{dense_block_apply.1} parent=46 // loop_footer_branch
                  %285 = sbr.rel target = $region49
                $region54: #{dense_block_apply.1} parent=46 // loop_exit
                  _
                %s294 = ssub.s32 16, 1
                loop: start=0, step=1, limit=1
                $region55: #{dense_block_apply.1} parent=46 // loop_pre_header
                  _
                $region56: #{dense_block_apply.1} parent=46 // loop_header
                  %s296 = sphi 0, %s300
                  %p297 = scmp.ge.s32.totalorder %s296, 1
                  %s301 = sphi %s234, %s234
                  %s302 = sphi %s229, %s229
                $region57: #{dense_block_apply.1} parent=46 // loop_header_branch
                  %299 = sbr.rel (%p297) target = $region61
                $region58: #{dense_block_apply.1} parent=46 // loop_body
                  %v303 = vld [vmem:[%s301] sm:%s294]
                  %304 = vst [vmem:[%s302] sm:%s294] %v303
                  %v305 = vld [vmem:[%s301 + $0x8] sm:%s294]
                  %306 = vst [vmem:[%s302 + $0x4] sm:%s294] %v305
                  %v307 = vld [vmem:[%s301 + $0x10] sm:%s294]
                  %308 = vst [vmem:[%s302 + $0x8] sm:%s294] %v307
                  %v309 = vld [vmem:[%s301 + $0x18] sm:%s294]
                  %310 = vst [vmem:[%s302 + $0xc] sm:%s294] %v309
                  %v311 = vld [vmem:[%s301 + $0x20] sm:%s294]
                  %312 = vst [vmem:[%s302 + $0x10] sm:%s294] %v311
                  %v313 = vld [vmem:[%s301 + $0x28] sm:%s294]
                  %314 = vst [vmem:[%s302 + $0x14] sm:%s294] %v313
                  %v315 = vld [vmem:[%s301 + $0x30] sm:%s294]
                  %316 = vst [vmem:[%s302 + $0x18] sm:%s294] %v315
                  %v317 = vld [vmem:[%s301 + $0x38] sm:%s294]
                  %318 = vst [vmem:[%s302 + $0x1c] sm:%s294] %v317
                  %v319 = vld [vmem:[%s301 + $0x40] sm:%s294]
                  %320 = vst [vmem:[%s302 + $0x20] sm:%s294] %v319
                  %v321 = vld [vmem:[%s301 + $0x48] sm:%s294]
                  %322 = vst [vmem:[%s302 + $0x24] sm:%s294] %v321
                  %v323 = vld [vmem:[%s301 + $0x50] sm:%s294]
                  %324 = vst [vmem:[%s302 + $0x28] sm:%s294] %v323
                  %v325 = vld [vmem:[%s301 + $0x58] sm:%s294]
                  %326 = vst [vmem:[%s302 + $0x2c] sm:%s294] %v325
                  %v327 = vld [vmem:[%s301 + $0x60] sm:%s294]
                  %328 = vst [vmem:[%s302 + $0x30] sm:%s294] %v327
                  %v329 = vld [vmem:[%s301 + $0x68] sm:%s294]
                  %330 = vst [vmem:[%s302 + $0x34] sm:%s294] %v329
                  %v331 = vld [vmem:[%s301 + $0x70] sm:%s294]
                  %332 = vst [vmem:[%s302 + $0x38] sm:%s294] %v331
                  %v333 = vld [vmem:[%s301 + $0x78] sm:%s294]
                  %334 = vst [vmem:[%s302 + $0x3c] sm:%s294] %v333
                $region59: #{dense_block_apply.1} parent=46 // loop_footer
                  %s300 = sadd.s32 1, %s296
                $region60: #{dense_block_apply.1} parent=46 // loop_footer_branch
                  %295 = sbr.rel target = $region56
                $region61: #{dense_block_apply.1} parent=46 // loop_exit
                  _
              $region47: #{dense_block_apply.1} parent=31 // pred_fallthru
                _
            $region32: #{dense_block_apply.1} parent=27 // pred_fallthru
              _
            // Predicated region
            $region33: #{dense_block_apply.1} parent=27 // pred_check
              _
            $region34: #{dense_block_apply.1} parent=27 // pred_check_branch
              %240 = sbr.rel (0) target = $region36
            $region35: #{dense_block_apply.1} parent=27 // pred_region
              %s242 = ssub.s32 16, 1
              loop: start=0, step=1, limit=1
              $region37: #{dense_block_apply.1} parent=35 // loop_pre_header
                _
              $region38: #{dense_block_apply.1} parent=35 // loop_header
                %s244 = sphi 0, %s248
                %p245 = scmp.ge.s32.totalorder %s244, 1
                %s249 = sphi %s234, %s234
                %s250 = sphi %s229, %s229
              $region39: #{dense_block_apply.1} parent=35 // loop_header_branch
                %247 = sbr.rel (%p245) target = $region43
              $region40: #{dense_block_apply.1} parent=35 // loop_body
                %v251 = vld [vmem:[%s249] sm:%s242]
                %252 = vst [vmem:[%s250] sm:%s242] %v251
                %v253 = vld [vmem:[%s249 + $0x8] sm:%s242]
                %254 = vst [vmem:[%s250 + $0x4] sm:%s242] %v253
                %v255 = vld [vmem:[%s249 + $0x10] sm:%s242]
                %256 = vst [vmem:[%s250 + $0x8] sm:%s242] %v255
                %v257 = vld [vmem:[%s249 + $0x18] sm:%s242]
                %258 = vst [vmem:[%s250 + $0xc] sm:%s242] %v257
                %v259 = vld [vmem:[%s249 + $0x20] sm:%s242]
                %260 = vst [vmem:[%s250 + $0x10] sm:%s242] %v259
                %v261 = vld [vmem:[%s249 + $0x28] sm:%s242]
                %262 = vst [vmem:[%s250 + $0x14] sm:%s242] %v261
                %v263 = vld [vmem:[%s249 + $0x30] sm:%s242]
                %264 = vst [vmem:[%s250 + $0x18] sm:%s242] %v263
                %v265 = vld [vmem:[%s249 + $0x38] sm:%s242]
                %266 = vst [vmem:[%s250 + $0x1c] sm:%s242] %v265
                %v267 = vld [vmem:[%s249 + $0x40] sm:%s242]
                %268 = vst [vmem:[%s250 + $0x20] sm:%s242] %v267
                %v269 = vld [vmem:[%s249 + $0x48] sm:%s242]
                %270 = vst [vmem:[%s250 + $0x24] sm:%s242] %v269
                %v271 = vld [vmem:[%s249 + $0x50] sm:%s242]
                %272 = vst [vmem:[%s250 + $0x28] sm:%s242] %v271
                %v273 = vld [vmem:[%s249 + $0x58] sm:%s242]
                %274 = vst [vmem:[%s250 + $0x2c] sm:%s242] %v273
                %v275 = vld [vmem:[%s249 + $0x60] sm:%s242]
                %276 = vst [vmem:[%s250 + $0x30] sm:%s242] %v275
                %v277 = vld [vmem:[%s249 + $0x68] sm:%s242]
                %278 = vst [vmem:[%s250 + $0x34] sm:%s242] %v277
                %v279 = vld [vmem:[%s249 + $0x70] sm:%s242]
                %280 = vst [vmem:[%s250 + $0x38] sm:%s242] %v279
                %v281 = vld [vmem:[%s249 + $0x78] sm:%s242]
                %282 = vst [vmem:[%s250 + $0x3c] sm:%s242] %v281
              $region41: #{dense_block_apply.1} parent=35 // loop_footer
                %s248 = sadd.s32 1, %s244
              $region42: #{dense_block_apply.1} parent=35 // loop_footer_branch
                %243 = sbr.rel target = $region38
              $region43: #{dense_block_apply.1} parent=35 // loop_exit
                _
            $region36: #{dense_block_apply.1} parent=27 // pred_fallthru
              _
          $region28: #{dense_block_apply.1} parent=23 // pred_fallthru
            _
          %335 = vnop
        $region24: #{dense_block_apply.1} parent=19 // pred_fallthru
          _
        // Predicated region
        $region62: #{dense_block_apply.1} parent=19 // pred_check
          %p336 = pneg %p106
        $region63: #{dense_block_apply.1} parent=19 // pred_check_branch
          %338 = sbr.rel (%p336) target = $region65
        $region64: #{dense_block_apply.1} parent=19 // pred_region
          %p339 = scmp.lt.s32.totalorder %s19, 1
          %s340 = scalar_select %p339, %s19, 1
          %s341 = scalar_lea.vmem %s2, %s340
        $region65: #{dense_block_apply.1} parent=19 // pred_fallthru
          _
        // Predicated region
        $region66: #{dense_block_apply.1} parent=19 // pred_check
          %p342 = pneg %p132
        $region67: #{dense_block_apply.1} parent=19 // pred_check_branch
          %344 = sbr.rel (%p342) target = $region69
        $region68: #{dense_block_apply.1} parent=19 // pred_region
          %p345 = scmp.lt.s32.totalorder %s19, 1
          %s346 = scalar_select %p345, %s19, 1
          %s347 = scalar_lea.vmem %s3, %s346
        $region69: #{dense_block_apply.1} parent=19 // pred_fallthru
          _
        // Predicated region
        $region70: #{dense_block_apply.1} parent=19 // pred_check
          %p348 = pneg %p158
        $region71: #{dense_block_apply.1} parent=19 // pred_check_branch
          %350 = sbr.rel (%p348) target = $region73
        $region72: #{dense_block_apply.1} parent=19 // pred_region
          %p351 = scmp.lt.s32.totalorder %s19, 1
          %s352 = scalar_select %p351, %s19, 1
          %s353 = scalar_lea.vmem %s4, %s352
        $region73: #{dense_block_apply.1} parent=19 // pred_fallthru
          _
      $region20: #{dense_block_apply.1} parent=5 // pred_fallthru
        _
      %p354 = scmp.le.s32.totalorder 1, %s11
      %p355 = scmp.lt.s32.totalorder %s11, 3
      %p356 = pnand %p354, %p355
      %p357 = pneg %p356
      // Predicated region
      $region74: #{dense_block_apply.1} parent=5 // pred_check
        _
      $region75: #{dense_block_apply.1} parent=5 // pred_check_branch
        %359 = sbr.rel (%p356) target = $region77
      $region76: #{dense_block_apply.1} parent=5 // pred_region
        %s360 = ssub.s32 %s11, 1
        %s361 = sand.u32 %s73, 1
        %s362 = sand.u32 %s73, 1
        %s363 = smul.addr %s362, 64
        %s364 = scalar_lea.vmem [#allocation3], %s363
        // Predicated region
        $region78: #{dense_block_apply.1} parent=76 // pred_check
          %p365 = pneg %p86
        $region79: #{dense_block_apply.1} parent=76 // pred_check_branch
          %367 = sbr.rel (%p365) target = $region81
        $region80: #{dense_block_apply.1} parent=76 // pred_region
          _
        $region81: #{dense_block_apply.1} parent=76 // pred_fallthru
          _
        %s368 = smul.u32 38, %s21
        %p369 = scmp.lt.s32.totalorder %s368, 37
        %s370 = scalar_select %p369, %s368, 37
        %p371 = scmp.lt.s32.totalorder %s23, 0
        %s372 = scalar_select %p371, %s23, 0
        %s373 = sadd.s32 %s372, %s370
        %s374 = smul.addr %s373, 4
        %s375 = scalar_lea.vmem %s0, %s374
        %p376 = pneg %p58
        %p377 = pneg %p55
        %s378 = sand.u32 %s73, 1
        %s379 = sand.u32 %s73, 1
        %s380 = smul.addr %s379, 64
        %s381 = scalar_lea.vmem [#allocation3], %s380
        %p382 = pneg %p86
        %p383 = pneg %p83
        %p384 = scmp.lt.s32.totalorder %s22, 1
        %s385 = scalar_select %p384, %s22, 1
        %s386 = scalar_lea.vmem %s2, %s385
        %p387 = pneg %p112
        %p388 = pneg %p109
        %p389 = scmp.lt.s32.totalorder %s22, 1
        %s390 = scalar_select %p389, %s22, 1
        %s391 = scalar_lea.vmem %s3, %s390
        %p392 = pneg %p138
        %p393 = pneg %p135
        %p394 = scmp.lt.s32.totalorder %s22, 1
        %s395 = scalar_select %p394, %s22, 1
        %s396 = scalar_lea.vmem %s4, %s395
        %p397 = pneg %p164
        %p398 = pneg %p161
        %p399 = pneg %p192
        %p400 = pneg %p189
        %s401 = sand.u32 %s179, 1
        %s402 = sand.u32 %s179, 1
        %s403 = smul.addr %s402, 304
        %s404 = scalar_lea.vmem [#allocation4], %s403
        %s405 = smul.u32 38, %s21
        %p406 = scmp.lt.s32.totalorder %s405, 37
        %s407 = scalar_select %p406, %s405, 37
        %p408 = scmp.lt.s32.totalorder %s23, 0
        %s409 = scalar_select %p408, %s23, 0
        %s410 = sadd.s32 %s409, %s407
        %s411 = smul.addr %s410, 4
        %s412 = scalar_lea.vmem %s0, %s411
        %s413 = smul.u32 38, %s21
        %s414 = smul.u32 16, %s23
        %p415 = scmp.lt.s32.totalorder %s22, 1
        %s416 = scalar_select %p415, %s22, 1
        %s417 = scalar_lea.vmem %s2, %s416
        %p418 = scmp.lt.s32.totalorder %s22, 1
        %s419 = scalar_select %p418, %s22, 1
        %s420 = scalar_lea.vmem %s3, %s419
        %p421 = scmp.lt.s32.totalorder %s22, 1
        %s422 = scalar_select %p421, %s22, 1
        %s423 = scalar_lea.vmem %s4, %s422
        %s424 = smul.u32 38, %s21
        %p426 = scmp.eq.s32.totalorder %s23, 0
        // Predicated region
        $region82: #{dense_block_apply.1} parent=76 // pred_check
          %p427 = pneg %p426
        $region83: #{dense_block_apply.1} parent=76 // pred_check_branch
          %429 = sbr.rel (%p427) target = $region85
        $region84: #{dense_block_apply.1} parent=76 // pred_region
          %430 = vst [vmem:[#allocation2] sm:$0xff] 0.0
          %431 = vst [vmem:[#allocation2 + $0x8] sm:$0xff] 0.0
          %432 = vst [vmem:[#allocation2 + $0x10] sm:$0xff] 0.0
          %433 = vst [vmem:[#allocation2 + $0x18] sm:$0xff] 0.0
          %434 = vst [vmem:[#allocation2 + $0x20] sm:$0xff] 0.0
          %435 = vst [vmem:[#allocation2 + $0x28] sm:$0xff] 0.0
          %436 = vst [vmem:[#allocation2 + $0x30] sm:$0xff] 0.0
          %437 = vst [vmem:[#allocation2 + $0x38] sm:$0xff] 0.0
          %438 = vst [vmem:[#allocation2 + $0x40] sm:$0xff] 0.0
          %439 = vst [vmem:[#allocation2 + $0x48] sm:$0xff] 0.0
          %440 = vst [vmem:[#allocation2 + $0x50] sm:$0xff] 0.0
          %441 = vst [vmem:[#allocation2 + $0x58] sm:$0xff] 0.0
          %442 = vst [vmem:[#allocation2 + $0x60] sm:$0xff] 0.0
          %443 = vst [vmem:[#allocation2 + $0x68] sm:$0xff] 0.0
          %444 = vst [vmem:[#allocation2 + $0x70] sm:$0xff] 0.0
          %445 = vst [vmem:[#allocation2 + $0x78] sm:$0xff] 0.0
          %446 = vst [vmem:[#allocation2 + $0x80] sm:$0xff] 0.0
          %447 = vst [vmem:[#allocation2 + $0x88] sm:$0xff] 0.0
          %448 = vst [vmem:[#allocation2 + $0x90] sm:$0xff] 0.0
          %449 = vst [vmem:[#allocation2 + $0x98] sm:$0xff] 0.0
          %450 = vst [vmem:[#allocation2 + $0xa0] sm:$0xff] 0.0
          %451 = vst [vmem:[#allocation2 + $0xa8] sm:$0xff] 0.0
          %452 = vst [vmem:[#allocation2 + $0xb0] sm:$0xff] 0.0
          %453 = vst [vmem:[#allocation2 + $0xb8] sm:$0xff] 0.0
          %454 = vst [vmem:[#allocation2 + $0xc0] sm:$0xff] 0.0
          %455 = vst [vmem:[#allocation2 + $0xc8] sm:$0xff] 0.0
          %456 = vst [vmem:[#allocation2 + $0xd0] sm:$0xff] 0.0
          %457 = vst [vmem:[#allocation2 + $0xd8] sm:$0xff] 0.0
          %458 = vst [vmem:[#allocation2 + $0xe0] sm:$0xff] 0.0
          %459 = vst [vmem:[#allocation2 + $0xe8] sm:$0xff] 0.0
          %460 = vst [vmem:[#allocation2 + $0xf0] sm:$0xff] 0.0
          %461 = vst [vmem:[#allocation2 + $0xf8] sm:$0xff] 0.0
          %462 = vst [vmem:[#allocation2 + $0x100] sm:$0xff] 0.0
          %463 = vst [vmem:[#allocation2 + $0x108] sm:$0xff] 0.0
          %464 = vst [vmem:[#allocation2 + $0x110] sm:$0xff] 0.0
          %465 = vst [vmem:[#allocation2 + $0x118] sm:$0xff] 0.0
          %466 = vst [vmem:[#allocation2 + $0x120] sm:$0xff] 0.0
          %467 = vst [vmem:[#allocation2 + $0x128] sm:$0xff] 0.0
        $region85: #{dense_block_apply.1} parent=76 // pred_fallthru
          _
        %v468 = vld [vmem:[#allocation2] sm:$0xff]
        %v469 = vld [vmem:[#allocation2 + $0x8] sm:$0xff]
        %v470 = vld [vmem:[#allocation2 + $0x10] sm:$0xff]
        %v471 = vld [vmem:[#allocation2 + $0x18] sm:$0xff]
        %v472 = vld [vmem:[#allocation2 + $0x20] sm:$0xff]
        %v473 = vld [vmem:[#allocation2 + $0x28] sm:$0xff]
        %v474 = vld [vmem:[#allocation2 + $0x30] sm:$0xff]
        %v475 = vld [vmem:[#allocation2 + $0x38] sm:$0xff]
        %v476 = vld [vmem:[#allocation2 + $0x40] sm:$0xff]
        %v477 = vld [vmem:[#allocation2 + $0x48] sm:$0xff]
        %v478 = vld [vmem:[#allocation2 + $0x50] sm:$0xff]
        %v479 = vld [vmem:[#allocation2 + $0x58] sm:$0xff]
        %v480 = vld [vmem:[#allocation2 + $0x60] sm:$0xff]
        %v481 = vld [vmem:[#allocation2 + $0x68] sm:$0xff]
        %v482 = vld [vmem:[#allocation2 + $0x70] sm:$0xff]
        %v483 = vld [vmem:[#allocation2 + $0x78] sm:$0xff]
        %v484 = vld [vmem:[#allocation2 + $0x80] sm:$0xff]
        %v485 = vld [vmem:[#allocation2 + $0x88] sm:$0xff]
        %v486 = vld [vmem:[#allocation2 + $0x90] sm:$0xff]
        %v487 = vld [vmem:[#allocation2 + $0x98] sm:$0xff]
        %v488 = vld [vmem:[#allocation2 + $0xa0] sm:$0xff]
        %v489 = vld [vmem:[#allocation2 + $0xa8] sm:$0xff]
        %v490 = vld [vmem:[#allocation2 + $0xb0] sm:$0xff]
        %v491 = vld [vmem:[#allocation2 + $0xb8] sm:$0xff]
        %v492 = vld [vmem:[#allocation2 + $0xc0] sm:$0xff]
        %v493 = vld [vmem:[#allocation2 + $0xc8] sm:$0xff]
        %v494 = vld [vmem:[#allocation2 + $0xd0] sm:$0xff]
        %v495 = vld [vmem:[#allocation2 + $0xd8] sm:$0xff]
        %v496 = vld [vmem:[#allocation2 + $0xe0] sm:$0xff]
        %v497 = vld [vmem:[#allocation2 + $0xe8] sm:$0xff]
        %v498 = vld [vmem:[#allocation2 + $0xf0] sm:$0xff]
        %v499 = vld [vmem:[#allocation2 + $0xf8] sm:$0xff]
        %v500 = vld [vmem:[#allocation2 + $0x100] sm:$0xff]
        %v501 = vld [vmem:[#allocation2 + $0x108] sm:$0xff]
        %v502 = vld [vmem:[#allocation2 + $0x110] sm:$0xff]
        %v503 = vld [vmem:[#allocation2 + $0x118] sm:$0xff]
        %v504 = vld [vmem:[#allocation2 + $0x120] sm:$0xff]
        %v505 = vld [vmem:[#allocation2 + $0x128] sm:$0xff]
        %v506 = vld [vmem:[%s412] sm:$0xf]
        %v507 = vld [vmem:[%s412 + $0x4] sm:$0xf]
        %v508 = vld [vmem:[%s412 + $0x8] sm:$0xf]
        %v509 = vld [vmem:[%s412 + $0xc] sm:$0xf]
        %v510 = vld [vmem:[%s412 + $0x10] sm:$0xf]
        %v511 = vld [vmem:[%s412 + $0x14] sm:$0xf]
        %v512 = vld [vmem:[%s412 + $0x18] sm:$0xf]
        %v513 = vld [vmem:[%s412 + $0x1c] sm:$0xf]
        %v514 = vld [vmem:[%s412 + $0x20] sm:$0xf]
        %v515 = vld [vmem:[%s412 + $0x24] sm:$0xf]
        %v516 = vld [vmem:[%s412 + $0x28] sm:$0xf]
        %v517 = vld [vmem:[%s412 + $0x2c] sm:$0xf]
        %v518 = vld [vmem:[%s412 + $0x30] sm:$0xf]
        %v519 = vld [vmem:[%s412 + $0x34] sm:$0xf]
        %v520 = vld [vmem:[%s412 + $0x38] sm:$0xf]
        %v521 = vld [vmem:[%s412 + $0x3c] sm:$0xf]
        %v522 = vld [vmem:[%s412 + $0x40] sm:$0xf]
        %v523 = vld [vmem:[%s412 + $0x44] sm:$0xf]
        %v524 = vld [vmem:[%s412 + $0x48] sm:$0xf]
        %v525 = vld [vmem:[%s412 + $0x4c] sm:$0xf]
        %v526 = vld [vmem:[%s412 + $0x50] sm:$0xf]
        %v527 = vld [vmem:[%s412 + $0x54] sm:$0xf]
        %v528 = vld [vmem:[%s412 + $0x58] sm:$0xf]
        %v529 = vld [vmem:[%s412 + $0x5c] sm:$0xf]
        %v530 = vld [vmem:[%s412 + $0x60] sm:$0xf]
        %v531 = vld [vmem:[%s412 + $0x64] sm:$0xf]
        %v532 = vld [vmem:[%s412 + $0x68] sm:$0xf]
        %v533 = vld [vmem:[%s412 + $0x6c] sm:$0xf]
        %v534 = vld [vmem:[%s412 + $0x70] sm:$0xf]
        %v535 = vld [vmem:[%s412 + $0x74] sm:$0xf]
        %v536 = vld [vmem:[%s412 + $0x78] sm:$0xf]
        %v537 = vld [vmem:[%s412 + $0x7c] sm:$0xf]
        %v538 = vld [vmem:[%s412 + $0x80] sm:$0xf]
        %v539 = vld [vmem:[%s412 + $0x84] sm:$0xf]
        %v540 = vld [vmem:[%s412 + $0x88] sm:$0xf]
        %v541 = vld [vmem:[%s412 + $0x8c] sm:$0xf]
        %v542 = vld [vmem:[%s412 + $0x90] sm:$0xf]
        %v543 = vld [vmem:[%s412 + $0x94] sm:$0xf]
        %v544 = vld [vmem:[%s364] sm:$0xf]
        %v545 = vld [vmem:[%s364 + $0x4] sm:$0xf]
        %v546 = vld [vmem:[%s364 + $0x8] sm:$0xf]
        %v547 = vld [vmem:[%s364 + $0xc] sm:$0xf]
        %v548 = vld [vmem:[%s364 + $0x10] sm:$0xf]
        %v549 = vld [vmem:[%s364 + $0x14] sm:$0xf]
        %v550 = vld [vmem:[%s364 + $0x18] sm:$0xf]
        %v551 = vld [vmem:[%s364 + $0x1c] sm:$0xf]
        %v552 = vld [vmem:[%s364 + $0x20] sm:$0xf]
        %v553 = vld [vmem:[%s364 + $0x24] sm:$0xf]
        %v554 = vld [vmem:[%s364 + $0x28] sm:$0xf]
        %v555 = vld [vmem:[%s364 + $0x2c] sm:$0xf]
        %v556 = vld [vmem:[%s364 + $0x30] sm:$0xf]
        %v557 = vld [vmem:[%s364 + $0x34] sm:$0xf]
        %v558 = vld [vmem:[%s364 + $0x38] sm:$0xf]
        %v559 = vld [vmem:[%s364 + $0x3c] sm:$0xf]
        %v598 = vunpack.c.l.b16 %v506
        %v599 = vunpack.c.l.b16 %v507
        %v600 = vunpack.c.l.b16 %v508
        %v601 = vunpack.c.l.b16 %v509
        %v602 = vunpack.c.l.b16 %v510
        %v603 = vunpack.c.l.b16 %v511
        %v604 = vunpack.c.l.b16 %v512
        %v605 = vunpack.c.l.b16 %v513
        %v606 = vunpack.c.l.b16 %v514
        %v607 = vunpack.c.l.b16 %v515
        %v608 = vunpack.c.l.b16 %v516
        %v609 = vunpack.c.l.b16 %v517
        %v610 = vunpack.c.l.b16 %v518
        %v611 = vunpack.c.l.b16 %v519
        %v612 = vunpack.c.l.b16 %v520
        %v613 = vunpack.c.l.b16 %v521
        %v614 = vunpack.c.l.b16 %v522
        %v615 = vunpack.c.l.b16 %v523
        %v616 = vunpack.c.l.b16 %v524
        %v617 = vunpack.c.l.b16 %v525
        %v618 = vunpack.c.l.b16 %v526
        %v619 = vunpack.c.l.b16 %v527
        %v620 = vunpack.c.l.b16 %v528
        %v621 = vunpack.c.l.b16 %v529
        %v622 = vunpack.c.l.b16 %v530
        %v623 = vunpack.c.l.b16 %v531
        %v624 = vunpack.c.l.b16 %v532
        %v625 = vunpack.c.l.b16 %v533
        %v626 = vunpack.c.l.b16 %v534
        %v627 = vunpack.c.l.b16 %v535
        %v628 = vunpack.c.l.b16 %v536
        %v629 = vunpack.c.l.b16 %v537
        %v630 = vunpack.c.l.b16 %v538
        %v631 = vunpack.c.l.b16 %v539
        %v632 = vunpack.c.l.b16 %v540
        %v633 = vunpack.c.l.b16 %v541
        %v634 = vunpack.c.l.b16 %v542
        %v635 = vunpack.c.l.b16 %v543
        %v636 = vpack.c.b16 %v599, %v598
        %v637 = vpack.c.b16 %v601, %v600
        %v638 = vpack.c.b16 %v603, %v602
        %v639 = vpack.c.b16 %v605, %v604
        %v640 = vpack.c.b16 %v607, %v606
        %v641 = vpack.c.b16 %v609, %v608
        %v642 = vpack.c.b16 %v611, %v610
        %v643 = vpack.c.b16 %v613, %v612
        %v644 = vpack.c.b16 %v615, %v614
        %v645 = vpack.c.b16 %v617, %v616
        %v646 = vpack.c.b16 %v619, %v618
        %v647 = vpack.c.b16 %v621, %v620
        %v648 = vpack.c.b16 %v623, %v622
        %v649 = vpack.c.b16 %v625, %v624
        %v650 = vpack.c.b16 %v627, %v626
        %v651 = vpack.c.b16 %v629, %v628
        %v652 = vpack.c.b16 %v631, %v630
        %v653 = vpack.c.b16 %v633, %v632
        %v654 = vpack.c.b16 %v635, %v634
        %v690 = vunpack.c.l.b16 %v544
        %v691 = vunpack.c.l.b16 %v545
        %v692 = vunpack.c.l.b16 %v546
        %v693 = vunpack.c.l.b16 %v547
        %v694 = vunpack.c.l.b16 %v548
        %v695 = vunpack.c.l.b16 %v549
        %v696 = vunpack.c.l.b16 %v550
        %v697 = vunpack.c.l.b16 %v551
        %v698 = vunpack.c.l.b16 %v552
        %v699 = vunpack.c.l.b16 %v553
        %v700 = vunpack.c.l.b16 %v554
        %v701 = vunpack.c.l.b16 %v555
        %v702 = vunpack.c.l.b16 %v556
        %v703 = vunpack.c.l.b16 %v557
        %v704 = vunpack.c.l.b16 %v558
        %v705 = vunpack.c.l.b16 %v559
        %v706 = vpack.c.b16 %v691, %v690
        %v707 = vpack.c.b16 %v693, %v692
        %v708 = vpack.c.b16 %v695, %v694
        %v709 = vpack.c.b16 %v697, %v696
        %v710 = vpack.c.b16 %v699, %v698
        %v711 = vpack.c.b16 %v701, %v700
        %v712 = vpack.c.b16 %v703, %v702
        %v713 = vpack.c.b16 %v705, %v704
        %722 = vmatprep.subr.bf16.mxu0 0
        %723 = vmatpush1.bf16.msra.mxu0 %v713
        %724 = vmatprep.subr.bf16.mxu0 0
        %725 = vmatpush1.bf16.msra.mxu0 %v712
        %726 = vmatprep.subr.bf16.mxu0 0
        %727 = vmatpush1.bf16.msra.mxu0 %v711
        %728 = vmatprep.subr.bf16.mxu0 0
        %729 = vmatpush1.bf16.msra.mxu0 %v710
        %730 = vmatprep.subr.bf16.mxu0 0
        %731 = vmatpush1.bf16.msra.mxu0 %v709
        %732 = vmatprep.subr.bf16.mxu0 0
        %733 = vmatpush1.bf16.msra.mxu0 %v708
        %734 = vmatprep.subr.bf16.mxu0 0
        %735 = vmatpush1.bf16.msra.mxu0 %v707
        %736 = vmatprep.subr.bf16.mxu0 0
        %737 = vmatpush1.bf16.msra.mxu0 %v706
        %738 = vmatprep.subr.bf16.mxu0 0
        %739 = vmatpush2.bf16.msra.mxu0 0
        %740 = vmatprep.subr.bf16.mxu0 0
        %741 = vmatpush2.bf16.msra.mxu0 0
        %742 = vmatprep.subr.bf16.mxu0 0
        %743 = vmatpush2.bf16.msra.mxu0 0
        %744 = vmatprep.subr.bf16.mxu0 0
        %745 = vmatpush2.bf16.msra.mxu0 0
        %746 = vmatprep.subr.bf16.mxu0 0
        %747 = vmatpush2.bf16.msra.mxu0 0
        %748 = vmatprep.subr.bf16.mxu0 0
        %749 = vmatpush2.bf16.msra.mxu0 0
        %750 = vmatprep.subr.bf16.mxu0 0
        %751 = vmatpush2.bf16.msra.mxu0 0
        %752 = vmatprep.subr.bf16.mxu0 0
        %753 = vmatpush2.bf16.msra.mxu0 0
        %754 = vmatprep.mubr.bf16.mxu0 0
        %755 = vmatmul.mubr.bf16.gmra.mxu0 %v636
        %v756 = vpop.f32.mrf.mxu0
        %v757 = vadd.f32 0.0, %v756
        %v758 = vpop.f32.mrf.mxu0
        %v759 = vpop.f32.mrf.mxu0
        %v760 = vadd.f32 0.0, %v759
        %v761 = vpop.f32.mrf.mxu0
        %762 = vmatprep.mubr.bf16.mxu0 0
        %763 = vmatmul.mubr.bf16.gmra.mxu0 %v637
        %v764 = vpop.f32.mrf.mxu0
        %v765 = vadd.f32 0.0, %v764
        %v766 = vpop.f32.mrf.mxu0
        %v767 = vpop.f32.mrf.mxu0
        %v768 = vadd.f32 0.0, %v767
        %v769 = vpop.f32.mrf.mxu0
        %770 = vmatprep.mubr.bf16.mxu0 0
        %771 = vmatmul.mubr.bf16.gmra.mxu0 %v638
        %v772 = vpop.f32.mrf.mxu0
        %v773 = vadd.f32 0.0, %v772
        %v774 = vpop.f32.mrf.mxu0
        %v775 = vpop.f32.mrf.mxu0
        %v776 = vadd.f32 0.0, %v775
        %v777 = vpop.f32.mrf.mxu0
        %778 = vmatprep.mubr.bf16.mxu0 0
        %779 = vmatmul.mubr.bf16.gmra.mxu0 %v639
        %v780 = vpop.f32.mrf.mxu0
        %v781 = vadd.f32 0.0, %v780
        %v782 = vpop.f32.mrf.mxu0
        %v783 = vpop.f32.mrf.mxu0
        %v784 = vadd.f32 0.0, %v783
        %v785 = vpop.f32.mrf.mxu0
        %786 = vmatprep.mubr.bf16.mxu0 0
        %787 = vmatmul.mubr.bf16.gmra.mxu0 %v640
        %v788 = vpop.f32.mrf.mxu0
        %v789 = vadd.f32 0.0, %v788
        %v790 = vpop.f32.mrf.mxu0
        %v791 = vpop.f32.mrf.mxu0
        %v792 = vadd.f32 0.0, %v791
        %v793 = vpop.f32.mrf.mxu0
        %794 = vmatprep.mubr.bf16.mxu0 0
        %795 = vmatmul.mubr.bf16.gmra.mxu0 %v641
        %v796 = vpop.f32.mrf.mxu0
        %v797 = vadd.f32 0.0, %v796
        %v798 = vpop.f32.mrf.mxu0
        %v799 = vpop.f32.mrf.mxu0
        %v800 = vadd.f32 0.0, %v799
        %v801 = vpop.f32.mrf.mxu0
        %802 = vmatprep.mubr.bf16.mxu0 0
        %803 = vmatmul.mubr.bf16.gmra.mxu0 %v642
        %v804 = vpop.f32.mrf.mxu0
        %v805 = vadd.f32 0.0, %v804
        %v806 = vpop.f32.mrf.mxu0
        %v807 = vpop.f32.mrf.mxu0
        %v808 = vadd.f32 0.0, %v807
        %v809 = vpop.f32.mrf.mxu0
        %810 = vmatprep.mubr.bf16.mxu0 0
        %811 = vmatmul.mubr.bf16.gmra.mxu0 %v643
        %v812 = vpop.f32.mrf.mxu0
        %v813 = vadd.f32 0.0, %v812
        %v814 = vpop.f32.mrf.mxu0
        %v815 = vpop.f32.mrf.mxu0
        %v816 = vadd.f32 0.0, %v815
        %v817 = vpop.f32.mrf.mxu0
        %818 = vmatprep.mubr.bf16.mxu0 0
        %819 = vmatmul.mubr.bf16.gmra.mxu0 %v644
        %v820 = vpop.f32.mrf.mxu0
        %v821 = vadd.f32 0.0, %v820
        %v822 = vpop.f32.mrf.mxu0
        %v823 = vpop.f32.mrf.mxu0
        %v824 = vadd.f32 0.0, %v823
        %v825 = vpop.f32.mrf.mxu0
        %826 = vmatprep.mubr.bf16.mxu0 0
        %827 = vmatmul.mubr.bf16.gmra.mxu0 %v645
        %v828 = vpop.f32.mrf.mxu0
        %v829 = vadd.f32 0.0, %v828
        %v830 = vpop.f32.mrf.mxu0
        %v831 = vpop.f32.mrf.mxu0
        %v832 = vadd.f32 0.0, %v831
        %v833 = vpop.f32.mrf.mxu0
        %834 = vmatprep.mubr.bf16.mxu0 0
        %835 = vmatmul.mubr.bf16.gmra.mxu0 %v646
        %v836 = vpop.f32.mrf.mxu0
        %v837 = vadd.f32 0.0, %v836
        %v838 = vpop.f32.mrf.mxu0
        %v839 = vpop.f32.mrf.mxu0
        %v840 = vadd.f32 0.0, %v839
        %v841 = vpop.f32.mrf.mxu0
        %842 = vmatprep.mubr.bf16.mxu0 0
        %843 = vmatmul.mubr.bf16.gmra.mxu0 %v647
        %v844 = vpop.f32.mrf.mxu0
        %v845 = vadd.f32 0.0, %v844
        %v846 = vpop.f32.mrf.mxu0
        %v847 = vpop.f32.mrf.mxu0
        %v848 = vadd.f32 0.0, %v847
        %v849 = vpop.f32.mrf.mxu0
        %850 = vmatprep.mubr.bf16.mxu0 0
        %851 = vmatmul.mubr.bf16.gmra.mxu0 %v648
        %v852 = vpop.f32.mrf.mxu0
        %v853 = vadd.f32 0.0, %v852
        %v854 = vpop.f32.mrf.mxu0
        %v855 = vpop.f32.mrf.mxu0
        %v856 = vadd.f32 0.0, %v855
        %v857 = vpop.f32.mrf.mxu0
        %858 = vmatprep.mubr.bf16.mxu0 0
        %859 = vmatmul.mubr.bf16.gmra.mxu0 %v649
        %v860 = vpop.f32.mrf.mxu0
        %v861 = vadd.f32 0.0, %v860
        %v862 = vpop.f32.mrf.mxu0
        %v863 = vpop.f32.mrf.mxu0
        %v864 = vadd.f32 0.0, %v863
        %v865 = vpop.f32.mrf.mxu0
        %866 = vmatprep.mubr.bf16.mxu0 0
        %867 = vmatmul.mubr.bf16.gmra.mxu0 %v650
        %v868 = vpop.f32.mrf.mxu0
        %v869 = vadd.f32 0.0, %v868
        %v870 = vpop.f32.mrf.mxu0
        %v871 = vpop.f32.mrf.mxu0
        %v872 = vadd.f32 0.0, %v871
        %v873 = vpop.f32.mrf.mxu0
        %874 = vmatprep.mubr.bf16.mxu0 0
        %875 = vmatmul.mubr.bf16.gmra.mxu0 %v651
        %v876 = vpop.f32.mrf.mxu0
        %v877 = vadd.f32 0.0, %v876
        %v878 = vpop.f32.mrf.mxu0
        %v879 = vpop.f32.mrf.mxu0
        %v880 = vadd.f32 0.0, %v879
        %v881 = vpop.f32.mrf.mxu0
        %882 = vmatprep.mubr.bf16.mxu0 0
        %883 = vmatmul.mubr.bf16.gmra.mxu0 %v652
        %v884 = vpop.f32.mrf.mxu0
        %v885 = vadd.f32 0.0, %v884
        %v886 = vpop.f32.mrf.mxu0
        %v887 = vpop.f32.mrf.mxu0
        %v888 = vadd.f32 0.0, %v887
        %v889 = vpop.f32.mrf.mxu0
        %890 = vmatprep.mubr.bf16.mxu0 0
        %891 = vmatmul.mubr.bf16.gmra.mxu0 %v653
        %v892 = vpop.f32.mrf.mxu0
        %v893 = vadd.f32 0.0, %v892
        %v894 = vpop.f32.mrf.mxu0
        %v895 = vpop.f32.mrf.mxu0
        %v896 = vadd.f32 0.0, %v895
        %v897 = vpop.f32.mrf.mxu0
        %898 = vmatprep.mubr.bf16.mxu0 0
        %899 = vmatmul.mubr.bf16.gmra.mxu0 %v654
        %v900 = vpop.f32.mrf.mxu0
        %v901 = vadd.f32 0.0, %v900
        %v902 = vpop.f32.mrf.mxu0
        %v903 = vpop.f32.mrf.mxu0
        %v904 = vadd.f32 0.0, %v903
        %v905 = vpop.f32.mrf.mxu0
        %906 = vdwg.mxu0
        %v907 = vadd.f32 %v468, %v757
        %v908 = vadd.f32 %v469, %v760
        %v909 = vadd.f32 %v470, %v765
        %v910 = vadd.f32 %v471, %v768
        %v911 = vadd.f32 %v472, %v773
        %v912 = vadd.f32 %v473, %v776
        %v913 = vadd.f32 %v474, %v781
        %v914 = vadd.f32 %v475, %v784
        %v915 = vadd.f32 %v476, %v789
        %v916 = vadd.f32 %v477, %v792
        %v917 = vadd.f32 %v478, %v797
        %v918 = vadd.f32 %v479, %v800
        %v919 = vadd.f32 %v480, %v805
        %v920 = vadd.f32 %v481, %v808
        %v921 = vadd.f32 %v482, %v813
        %v922 = vadd.f32 %v483, %v816
        %v923 = vadd.f32 %v484, %v821
        %v924 = vadd.f32 %v485, %v824
        %v925 = vadd.f32 %v486, %v829
        %v926 = vadd.f32 %v487, %v832
        %v927 = vadd.f32 %v488, %v837
        %v928 = vadd.f32 %v489, %v840
        %v929 = vadd.f32 %v490, %v845
        %v930 = vadd.f32 %v491, %v848
        %v931 = vadd.f32 %v492, %v853
        %v932 = vadd.f32 %v493, %v856
        %v933 = vadd.f32 %v494, %v861
        %v934 = vadd.f32 %v495, %v864
        %v935 = vadd.f32 %v496, %v869
        %v936 = vadd.f32 %v497, %v872
        %v937 = vadd.f32 %v498, %v877
        %v938 = vadd.f32 %v499, %v880
        %v939 = vadd.f32 %v500, %v885
        %v940 = vadd.f32 %v501, %v888
        %v941 = vadd.f32 %v502, %v893
        %v942 = vadd.f32 %v503, %v896
        %v943 = vadd.f32 %v504, %v901
        %v944 = vadd.f32 %v505, %v904
        %945 = vst [vmem:[#allocation2] sm:$0xff] %v907
        %946 = vst [vmem:[#allocation2 + $0x8] sm:$0xff] %v908
        %947 = vst [vmem:[#allocation2 + $0x10] sm:$0xff] %v909
        %948 = vst [vmem:[#allocation2 + $0x18] sm:$0xff] %v910
        %949 = vst [vmem:[#allocation2 + $0x20] sm:$0xff] %v911
        %950 = vst [vmem:[#allocation2 + $0x28] sm:$0xff] %v912
        %951 = vst [vmem:[#allocation2 + $0x30] sm:$0xff] %v913
        %952 = vst [vmem:[#allocation2 + $0x38] sm:$0xff] %v914
        %953 = vst [vmem:[#allocation2 + $0x40] sm:$0xff] %v915
        %954 = vst [vmem:[#allocation2 + $0x48] sm:$0xff] %v916
        %955 = vst [vmem:[#allocation2 + $0x50] sm:$0xff] %v917
        %956 = vst [vmem:[#allocation2 + $0x58] sm:$0xff] %v918
        %957 = vst [vmem:[#allocation2 + $0x60] sm:$0xff] %v919
        %958 = vst [vmem:[#allocation2 + $0x68] sm:$0xff] %v920
        %959 = vst [vmem:[#allocation2 + $0x70] sm:$0xff] %v921
        %960 = vst [vmem:[#allocation2 + $0x78] sm:$0xff] %v922
        %961 = vst [vmem:[#allocation2 + $0x80] sm:$0xff] %v923
        %962 = vst [vmem:[#allocation2 + $0x88] sm:$0xff] %v924
        %963 = vst [vmem:[#allocation2 + $0x90] sm:$0xff] %v925
        %964 = vst [vmem:[#allocation2 + $0x98] sm:$0xff] %v926
        %965 = vst [vmem:[#allocation2 + $0xa0] sm:$0xff] %v927
        %966 = vst [vmem:[#allocation2 + $0xa8] sm:$0xff] %v928
        %967 = vst [vmem:[#allocation2 + $0xb0] sm:$0xff] %v929
        %968 = vst [vmem:[#allocation2 + $0xb8] sm:$0xff] %v930
        %969 = vst [vmem:[#allocation2 + $0xc0] sm:$0xff] %v931
        %970 = vst [vmem:[#allocation2 + $0xc8] sm:$0xff] %v932
        %971 = vst [vmem:[#allocation2 + $0xd0] sm:$0xff] %v933
        %972 = vst [vmem:[#allocation2 + $0xd8] sm:$0xff] %v934
        %973 = vst [vmem:[#allocation2 + $0xe0] sm:$0xff] %v935
        %974 = vst [vmem:[#allocation2 + $0xe8] sm:$0xff] %v936
        %975 = vst [vmem:[#allocation2 + $0xf0] sm:$0xff] %v937
        %976 = vst [vmem:[#allocation2 + $0xf8] sm:$0xff] %v938
        %977 = vst [vmem:[#allocation2 + $0x100] sm:$0xff] %v939
        %978 = vst [vmem:[#allocation2 + $0x108] sm:$0xff] %v940
        %979 = vst [vmem:[#allocation2 + $0x110] sm:$0xff] %v941
        %980 = vst [vmem:[#allocation2 + $0x118] sm:$0xff] %v942
        %981 = vst [vmem:[#allocation2 + $0x120] sm:$0xff] %v943
        %982 = vst [vmem:[#allocation2 + $0x128] sm:$0xff] %v944
        // Predicated region
        $region86: #{dense_block_apply.1} parent=76 // pred_check
          %p983 = pneg %p426
        $region87: #{dense_block_apply.1} parent=76 // pred_check_branch
          %985 = sbr.rel (%p983) target = $region89
        $region88: #{dense_block_apply.1} parent=76 // pred_region
          %v986 = vld [vmem:[#allocation2] sm:$0xff]
          %v987 = vld [vmem:[#allocation2 + $0x8] sm:$0xff]
          %v988 = vld [vmem:[#allocation2 + $0x10] sm:$0xff]
          %v989 = vld [vmem:[#allocation2 + $0x18] sm:$0xff]
          %v990 = vld [vmem:[#allocation2 + $0x20] sm:$0xff]
          %v991 = vld [vmem:[#allocation2 + $0x28] sm:$0xff]
          %v992 = vld [vmem:[#allocation2 + $0x30] sm:$0xff]
          %v993 = vld [vmem:[#allocation2 + $0x38] sm:$0xff]
          %v994 = vld [vmem:[#allocation2 + $0x40] sm:$0xff]
          %v995 = vld [vmem:[#allocation2 + $0x48] sm:$0xff]
          %v996 = vld [vmem:[#allocation2 + $0x50] sm:$0xff]
          %v997 = vld [vmem:[#allocation2 + $0x58] sm:$0xff]
          %v998 = vld [vmem:[#allocation2 + $0x60] sm:$0xff]
          %v999 = vld [vmem:[#allocation2 + $0x68] sm:$0xff]
          %v1000 = vld [vmem:[#allocation2 + $0x70] sm:$0xff]
          %v1001 = vld [vmem:[#allocation2 + $0x78] sm:$0xff]
          %v1002 = vld [vmem:[#allocation2 + $0x80] sm:$0xff]
          %v1003 = vld [vmem:[#allocation2 + $0x88] sm:$0xff]
          %v1004 = vld [vmem:[#allocation2 + $0x90] sm:$0xff]
          %v1005 = vld [vmem:[#allocation2 + $0x98] sm:$0xff]
          %v1006 = vld [vmem:[#allocation2 + $0xa0] sm:$0xff]
          %v1007 = vld [vmem:[#allocation2 + $0xa8] sm:$0xff]
          %v1008 = vld [vmem:[#allocation2 + $0xb0] sm:$0xff]
          %v1009 = vld [vmem:[#allocation2 + $0xb8] sm:$0xff]
          %v1010 = vld [vmem:[#allocation2 + $0xc0] sm:$0xff]
          %v1011 = vld [vmem:[#allocation2 + $0xc8] sm:$0xff]
          %v1012 = vld [vmem:[#allocation2 + $0xd0] sm:$0xff]
          %v1013 = vld [vmem:[#allocation2 + $0xd8] sm:$0xff]
          %v1014 = vld [vmem:[#allocation2 + $0xe0] sm:$0xff]
          %v1015 = vld [vmem:[#allocation2 + $0xe8] sm:$0xff]
          %v1016 = vld [vmem:[#allocation2 + $0xf0] sm:$0xff]
          %v1017 = vld [vmem:[#allocation2 + $0xf8] sm:$0xff]
          %v1018 = vld [vmem:[#allocation2 + $0x100] sm:$0xff]
          %v1019 = vld [vmem:[#allocation2 + $0x108] sm:$0xff]
          %v1020 = vld [vmem:[#allocation2 + $0x110] sm:$0xff]
          %v1021 = vld [vmem:[#allocation2 + $0x118] sm:$0xff]
          %v1022 = vld [vmem:[#allocation2 + $0x120] sm:$0xff]
          %v1023 = vld [vmem:[#allocation2 + $0x128] sm:$0xff]
          %v1024 = vld [vmem:[%s417] sm:$0x1]
          %v1026 = vlaneseq
          %v1027 = vshrl.u32 %v1026, 7
          %v1028 = vsub.s32 0, %v1027
          %v1029 = vrot.slane %v1024, %v1028
          %v1031 = vmul.f32 %v986, %v1029
          %v1032 = vmul.f32 %v987, %v1029
          %v1033 = vmul.f32 %v988, %v1029
          %v1034 = vmul.f32 %v989, %v1029
          %v1035 = vmul.f32 %v990, %v1029
          %v1036 = vmul.f32 %v991, %v1029
          %v1037 = vmul.f32 %v992, %v1029
          %v1038 = vmul.f32 %v993, %v1029
          %v1039 = vmul.f32 %v994, %v1029
          %v1040 = vmul.f32 %v995, %v1029
          %v1041 = vmul.f32 %v996, %v1029
          %v1042 = vmul.f32 %v997, %v1029
          %v1043 = vmul.f32 %v998, %v1029
          %v1044 = vmul.f32 %v999, %v1029
          %v1045 = vmul.f32 %v1000, %v1029
          %v1046 = vmul.f32 %v1001, %v1029
          %v1047 = vmul.f32 %v1002, %v1029
          %v1048 = vmul.f32 %v1003, %v1029
          %v1049 = vmul.f32 %v1004, %v1029
          %v1050 = vmul.f32 %v1005, %v1029
          %v1051 = vmul.f32 %v1006, %v1029
          %v1052 = vmul.f32 %v1007, %v1029
          %v1053 = vmul.f32 %v1008, %v1029
          %v1054 = vmul.f32 %v1009, %v1029
          %v1055 = vmul.f32 %v1010, %v1029
          %v1056 = vmul.f32 %v1011, %v1029
          %v1057 = vmul.f32 %v1012, %v1029
          %v1058 = vmul.f32 %v1013, %v1029
          %v1059 = vmul.f32 %v1014, %v1029
          %v1060 = vmul.f32 %v1015, %v1029
          %v1061 = vmul.f32 %v1016, %v1029
          %v1062 = vmul.f32 %v1017, %v1029
          %v1063 = vmul.f32 %v1018, %v1029
          %v1064 = vmul.f32 %v1019, %v1029
          %v1065 = vmul.f32 %v1020, %v1029
          %v1066 = vmul.f32 %v1021, %v1029
          %v1067 = vmul.f32 %v1022, %v1029
          %v1068 = vmul.f32 %v1023, %v1029
          %v1069 = vld [vmem:[%s420] sm:$0x1]
          %v1071 = vlaneseq
          %v1072 = vshrl.u32 %v1071, 7
          %v1073 = vsub.s32 0, %v1072
          %v1074 = vrot.slane %v1069, %v1073
          %v1076 = vadd.f32 %v1031, %v1074
          %v1077 = vadd.f32 %v1032, %v1074
          %v1078 = vadd.f32 %v1033, %v1074
          %v1079 = vadd.f32 %v1034, %v1074
          %v1080 = vadd.f32 %v1035, %v1074
          %v1081 = vadd.f32 %v1036, %v1074
          %v1082 = vadd.f32 %v1037, %v1074
          %v1083 = vadd.f32 %v1038, %v1074
          %v1084 = vadd.f32 %v1039, %v1074
          %v1085 = vadd.f32 %v1040, %v1074
          %v1086 = vadd.f32 %v1041, %v1074
          %v1087 = vadd.f32 %v1042, %v1074
          %v1088 = vadd.f32 %v1043, %v1074
          %v1089 = vadd.f32 %v1044, %v1074
          %v1090 = vadd.f32 %v1045, %v1074
          %v1091 = vadd.f32 %v1046, %v1074
          %v1092 = vadd.f32 %v1047, %v1074
          %v1093 = vadd.f32 %v1048, %v1074
          %v1094 = vadd.f32 %v1049, %v1074
          %v1095 = vadd.f32 %v1050, %v1074
          %v1096 = vadd.f32 %v1051, %v1074
          %v1097 = vadd.f32 %v1052, %v1074
          %v1098 = vadd.f32 %v1053, %v1074
          %v1099 = vadd.f32 %v1054, %v1074
          %v1100 = vadd.f32 %v1055, %v1074
          %v1101 = vadd.f32 %v1056, %v1074
          %v1102 = vadd.f32 %v1057, %v1074
          %v1103 = vadd.f32 %v1058, %v1074
          %v1104 = vadd.f32 %v1059, %v1074
          %v1105 = vadd.f32 %v1060, %v1074
          %v1106 = vadd.f32 %v1061, %v1074
          %v1107 = vadd.f32 %v1062, %v1074
          %v1108 = vadd.f32 %v1063, %v1074
          %v1109 = vadd.f32 %v1064, %v1074
          %v1110 = vadd.f32 %v1065, %v1074
          %v1111 = vadd.f32 %v1066, %v1074
          %v1112 = vadd.f32 %v1067, %v1074
          %v1113 = vadd.f32 %v1068, %v1074
          %vm1114 = vcmp.ge.f32.partialorder %v1076, 0.0
          %vm1115 = vcmp.ge.f32.partialorder %v1077, 0.0
          %vm1116 = vcmp.ge.f32.partialorder %v1078, 0.0
          %vm1117 = vcmp.ge.f32.partialorder %v1079, 0.0
          %vm1118 = vcmp.ge.f32.partialorder %v1080, 0.0
          %vm1119 = vcmp.ge.f32.partialorder %v1081, 0.0
          %vm1120 = vcmp.ge.f32.partialorder %v1082, 0.0
          %vm1121 = vcmp.ge.f32.partialorder %v1083, 0.0
          %vm1122 = vcmp.ge.f32.partialorder %v1084, 0.0
          %vm1123 = vcmp.ge.f32.partialorder %v1085, 0.0
          %vm1124 = vcmp.ge.f32.partialorder %v1086, 0.0
          %vm1125 = vcmp.ge.f32.partialorder %v1087, 0.0
          %vm1126 = vcmp.ge.f32.partialorder %v1088, 0.0
          %vm1127 = vcmp.ge.f32.partialorder %v1089, 0.0
          %vm1128 = vcmp.ge.f32.partialorder %v1090, 0.0
          %vm1129 = vcmp.ge.f32.partialorder %v1091, 0.0
          %vm1130 = vcmp.ge.f32.partialorder %v1092, 0.0
          %vm1131 = vcmp.ge.f32.partialorder %v1093, 0.0
          %vm1132 = vcmp.ge.f32.partialorder %v1094, 0.0
          %vm1133 = vcmp.ge.f32.partialorder %v1095, 0.0
          %vm1134 = vcmp.ge.f32.partialorder %v1096, 0.0
          %vm1135 = vcmp.ge.f32.partialorder %v1097, 0.0
          %vm1136 = vcmp.ge.f32.partialorder %v1098, 0.0
          %vm1137 = vcmp.ge.f32.partialorder %v1099, 0.0
          %vm1138 = vcmp.ge.f32.partialorder %v1100, 0.0
          %vm1139 = vcmp.ge.f32.partialorder %v1101, 0.0
          %vm1140 = vcmp.ge.f32.partialorder %v1102, 0.0
          %vm1141 = vcmp.ge.f32.partialorder %v1103, 0.0
          %vm1142 = vcmp.ge.f32.partialorder %v1104, 0.0
          %vm1143 = vcmp.ge.f32.partialorder %v1105, 0.0
          %vm1144 = vcmp.ge.f32.partialorder %v1106, 0.0
          %vm1145 = vcmp.ge.f32.partialorder %v1107, 0.0
          %vm1146 = vcmp.ge.f32.partialorder %v1108, 0.0
          %vm1147 = vcmp.ge.f32.partialorder %v1109, 0.0
          %vm1148 = vcmp.ge.f32.partialorder %v1110, 0.0
          %vm1149 = vcmp.ge.f32.partialorder %v1111, 0.0
          %vm1150 = vcmp.ge.f32.partialorder %v1112, 0.0
          %vm1151 = vcmp.ge.f32.partialorder %v1113, 0.0
          %v1152 = vld [vmem:[%s423] sm:$0x1]
          %v1154 = vlaneseq
          %v1155 = vshrl.u32 %v1154, 7
          %v1156 = vsub.s32 0, %v1155
          %v1157 = vrot.slane %v1152, %v1156
          %v1159 = vmul.f32 %v1157, %v1076
          %v1160 = vmul.f32 %v1157, %v1077
          %v1161 = vmul.f32 %v1157, %v1078
          %v1162 = vmul.f32 %v1157, %v1079
          %v1163 = vmul.f32 %v1157, %v1080
          %v1164 = vmul.f32 %v1157, %v1081
          %v1165 = vmul.f32 %v1157, %v1082
          %v1166 = vmul.f32 %v1157, %v1083
          %v1167 = vmul.f32 %v1157, %v1084
          %v1168 = vmul.f32 %v1157, %v1085
          %v1169 = vmul.f32 %v1157, %v1086
          %v1170 = vmul.f32 %v1157, %v1087
          %v1171 = vmul.f32 %v1157, %v1088
          %v1172 = vmul.f32 %v1157, %v1089
          %v1173 = vmul.f32 %v1157, %v1090
          %v1174 = vmul.f32 %v1157, %v1091
          %v1175 = vmul.f32 %v1157, %v1092
          %v1176 = vmul.f32 %v1157, %v1093
          %v1177 = vmul.f32 %v1157, %v1094
          %v1178 = vmul.f32 %v1157, %v1095
          %v1179 = vmul.f32 %v1157, %v1096
          %v1180 = vmul.f32 %v1157, %v1097
          %v1181 = vmul.f32 %v1157, %v1098
          %v1182 = vmul.f32 %v1157, %v1099
          %v1183 = vmul.f32 %v1157, %v1100
          %v1184 = vmul.f32 %v1157, %v1101
          %v1185 = vmul.f32 %v1157, %v1102
          %v1186 = vmul.f32 %v1157, %v1103
          %v1187 = vmul.f32 %v1157, %v1104
          %v1188 = vmul.f32 %v1157, %v1105
          %v1189 = vmul.f32 %v1157, %v1106
          %v1190 = vmul.f32 %v1157, %v1107
          %v1191 = vmul.f32 %v1157, %v1108
          %v1192 = vmul.f32 %v1157, %v1109
          %v1193 = vmul.f32 %v1157, %v1110
          %v1194 = vmul.f32 %v1157, %v1111
          %v1195 = vmul.f32 %v1157, %v1112
          %v1196 = vmul.f32 %v1157, %v1113
          %v1197 = vsel %vm1114, %v1076, %v1159
          %v1198 = vsel %vm1115, %v1077, %v1160
          %v1199 = vsel %vm1116, %v1078, %v1161
          %v1200 = vsel %vm1117, %v1079, %v1162
          %v1201 = vsel %vm1118, %v1080, %v1163
          %v1202 = vsel %vm1119, %v1081, %v1164
          %v1203 = vsel %vm1120, %v1082, %v1165
          %v1204 = vsel %vm1121, %v1083, %v1166
          %v1205 = vsel %vm1122, %v1084, %v1167
          %v1206 = vsel %vm1123, %v1085, %v1168
          %v1207 = vsel %vm1124, %v1086, %v1169
          %v1208 = vsel %vm1125, %v1087, %v1170
          %v1209 = vsel %vm1126, %v1088, %v1171
          %v1210 = vsel %vm1127, %v1089, %v1172
          %v1211 = vsel %vm1128, %v1090, %v1173
          %v1212 = vsel %vm1129, %v1091, %v1174
          %v1213 = vsel %vm1130, %v1092, %v1175
          %v1214 = vsel %vm1131, %v1093, %v1176
          %v1215 = vsel %vm1132, %v1094, %v1177
          %v1216 = vsel %vm1133, %v1095, %v1178
          %v1217 = vsel %vm1134, %v1096, %v1179
          %v1218 = vsel %vm1135, %v1097, %v1180
          %v1219 = vsel %vm1136, %v1098, %v1181
          %v1220 = vsel %vm1137, %v1099, %v1182
          %v1221 = vsel %vm1138, %v1100, %v1183
          %v1222 = vsel %vm1139, %v1101, %v1184
          %v1223 = vsel %vm1140, %v1102, %v1185
          %v1224 = vsel %vm1141, %v1103, %v1186
          %v1225 = vsel %vm1142, %v1104, %v1187
          %v1226 = vsel %vm1143, %v1105, %v1188
          %v1227 = vsel %vm1144, %v1106, %v1189
          %v1228 = vsel %vm1145, %v1107, %v1190
          %v1229 = vsel %vm1146, %v1108, %v1191
          %v1230 = vsel %vm1147, %v1109, %v1192
          %v1231 = vsel %vm1148, %v1110, %v1193
          %v1232 = vsel %vm1149, %v1111, %v1194
          %v1233 = vsel %vm1150, %v1112, %v1195
          %v1234 = vsel %vm1151, %v1113, %v1196
          %1235 = vst [vmem:[%s404] sm:$0xff] %v1197
          %1236 = vst [vmem:[%s404 + $0x8] sm:$0xff] %v1198
          %1237 = vst [vmem:[%s404 + $0x10] sm:$0xff] %v1199
          %1238 = vst [vmem:[%s404 + $0x18] sm:$0xff] %v1200
          %1239 = vst [vmem:[%s404 + $0x20] sm:$0xff] %v1201
          %1240 = vst [vmem:[%s404 + $0x28] sm:$0xff] %v1202
          %1241 = vst [vmem:[%s404 + $0x30] sm:$0xff] %v1203
          %1242 = vst [vmem:[%s404 + $0x38] sm:$0xff] %v1204
          %1243 = vst [vmem:[%s404 + $0x40] sm:$0xff] %v1205
          %1244 = vst [vmem:[%s404 + $0x48] sm:$0xff] %v1206
          %1245 = vst [vmem:[%s404 + $0x50] sm:$0xff] %v1207
          %1246 = vst [vmem:[%s404 + $0x58] sm:$0xff] %v1208
          %1247 = vst [vmem:[%s404 + $0x60] sm:$0xff] %v1209
          %1248 = vst [vmem:[%s404 + $0x68] sm:$0xff] %v1210
          %1249 = vst [vmem:[%s404 + $0x70] sm:$0xff] %v1211
          %1250 = vst [vmem:[%s404 + $0x78] sm:$0xff] %v1212
          %1251 = vst [vmem:[%s404 + $0x80] sm:$0xff] %v1213
          %1252 = vst [vmem:[%s404 + $0x88] sm:$0xff] %v1214
          %1253 = vst [vmem:[%s404 + $0x90] sm:$0xff] %v1215
          %1254 = vst [vmem:[%s404 + $0x98] sm:$0xff] %v1216
          %1255 = vst [vmem:[%s404 + $0xa0] sm:$0xff] %v1217
          %1256 = vst [vmem:[%s404 + $0xa8] sm:$0xff] %v1218
          %1257 = vst [vmem:[%s404 + $0xb0] sm:$0xff] %v1219
          %1258 = vst [vmem:[%s404 + $0xb8] sm:$0xff] %v1220
          %1259 = vst [vmem:[%s404 + $0xc0] sm:$0xff] %v1221
          %1260 = vst [vmem:[%s404 + $0xc8] sm:$0xff] %v1222
          %1261 = vst [vmem:[%s404 + $0xd0] sm:$0xff] %v1223
          %1262 = vst [vmem:[%s404 + $0xd8] sm:$0xff] %v1224
          %1263 = vst [vmem:[%s404 + $0xe0] sm:$0xff] %v1225
          %1264 = vst [vmem:[%s404 + $0xe8] sm:$0xff] %v1226
          %1265 = vst [vmem:[%s404 + $0xf0] sm:$0xff] %v1227
          %1266 = vst [vmem:[%s404 + $0xf8] sm:$0xff] %v1228
          %1267 = vst [vmem:[%s404 + $0x100] sm:$0xff] %v1229
          %1268 = vst [vmem:[%s404 + $0x108] sm:$0xff] %v1230
          %1269 = vst [vmem:[%s404 + $0x110] sm:$0xff] %v1231
          %1270 = vst [vmem:[%s404 + $0x118] sm:$0xff] %v1232
          %1271 = vst [vmem:[%s404 + $0x120] sm:$0xff] %v1233
          %1272 = vst [vmem:[%s404 + $0x128] sm:$0xff] %v1234
        $region89: #{dense_block_apply.1} parent=76 // pred_fallthru
          _
        %s1273 = sand.u32 %s179, 1
        %s1274 = sand.u32 %s179, 1
        %s1275 = smul.addr %s1274, 304
        %s1276 = scalar_lea.vmem [#allocation4], %s1275
        // Predicated region
        $region90: #{dense_block_apply.1} parent=76 // pred_check
          %p1277 = pneg %p189
        $region91: #{dense_block_apply.1} parent=76 // pred_check_branch
          %1279 = sbr.rel (%p1277) target = $region93
        $region92: #{dense_block_apply.1} parent=76 // pred_region
          %s1280 = smul.u32 38, %s21
          %s1281 = smul.addr %s1280, 2
          %s1282 = sadd.s32 %s22, %s1281
          %s1283 = smul.addr %s1282, 8
          %s1284 = scalar_lea.vmem %s5, %s1283
          // Predicated region
          $region94: #{dense_block_apply.1} parent=92 // pred_check
            _
          $region95: #{dense_block_apply.1} parent=92 // pred_check_branch
            %1286 = sbr.rel (0) target = $region97
          $region96: #{dense_block_apply.1} parent=92 // pred_region
            // Predicated region
            $region98: #{dense_block_apply.1} parent=96 // pred_check
              _
            $region99: #{dense_block_apply.1} parent=96 // pred_check_branch
              %1288 = sbr.rel (0) target = $region101
            $region100: #{dense_block_apply.1} parent=96 // pred_region
              // Predicated region
              $region113: #{dense_block_apply.1} parent=100 // pred_check
                _
              $region114: #{dense_block_apply.1} parent=100 // pred_check_branch
                %1378 = sbr.rel (0) target = $region116
              $region115: #{dense_block_apply.1} parent=100 // pred_region
                loop: start=0, step=1, limit=1
                $region117: #{dense_block_apply.1} parent=115 // loop_pre_header
                  _
                $region118: #{dense_block_apply.1} parent=115 // loop_header
                  %s1380 = sphi 0, %s1384
                  %p1381 = scmp.ge.s32.totalorder %s1380, 1
                  %s1385 = sphi %s1276, %s1276
                  %s1386 = sphi %s1284, %s1284
                $region119: #{dense_block_apply.1} parent=115 // loop_header_branch
                  %1383 = sbr.rel (%p1381) target = $region123
                $region120: #{dense_block_apply.1} parent=115 // loop_body
                  %v1387 = vld [vmem:[%s1385] sm:$0xff]
                  %1388 = vst [vmem:[%s1386] sm:$0xff] %v1387
                  %v1389 = vld [vmem:[%s1385 + $0x8] sm:$0xff]
                  %1390 = vst [vmem:[%s1386 + $0x10] sm:$0xff] %v1389
                  %v1391 = vld [vmem:[%s1385 + $0x10] sm:$0xff]
                  %1392 = vst [vmem:[%s1386 + $0x20] sm:$0xff] %v1391
                  %v1393 = vld [vmem:[%s1385 + $0x18] sm:$0xff]
                  %1394 = vst [vmem:[%s1386 + $0x30] sm:$0xff] %v1393
                  %v1395 = vld [vmem:[%s1385 + $0x20] sm:$0xff]
                  %1396 = vst [vmem:[%s1386 + $0x40] sm:$0xff] %v1395
                  %v1397 = vld [vmem:[%s1385 + $0x28] sm:$0xff]
                  %1398 = vst [vmem:[%s1386 + $0x50] sm:$0xff] %v1397
                  %v1399 = vld [vmem:[%s1385 + $0x30] sm:$0xff]
                  %1400 = vst [vmem:[%s1386 + $0x60] sm:$0xff] %v1399
                  %v1401 = vld [vmem:[%s1385 + $0x38] sm:$0xff]
                  %1402 = vst [vmem:[%s1386 + $0x70] sm:$0xff] %v1401
                  %v1403 = vld [vmem:[%s1385 + $0x40] sm:$0xff]
                  %1404 = vst [vmem:[%s1386 + $0x80] sm:$0xff] %v1403
                  %v1405 = vld [vmem:[%s1385 + $0x48] sm:$0xff]
                  %1406 = vst [vmem:[%s1386 + $0x90] sm:$0xff] %v1405
                  %v1407 = vld [vmem:[%s1385 + $0x50] sm:$0xff]
                  %1408 = vst [vmem:[%s1386 + $0xa0] sm:$0xff] %v1407
                  %v1409 = vld [vmem:[%s1385 + $0x58] sm:$0xff]
                  %1410 = vst [vmem:[%s1386 + $0xb0] sm:$0xff] %v1409
                  %v1411 = vld [vmem:[%s1385 + $0x60] sm:$0xff]
                  %1412 = vst [vmem:[%s1386 + $0xc0] sm:$0xff] %v1411
                  %v1413 = vld [vmem:[%s1385 + $0x68] sm:$0xff]
                  %1414 = vst [vmem:[%s1386 + $0xd0] sm:$0xff] %v1413
                  %v1415 = vld [vmem:[%s1385 + $0x70] sm:$0xff]
                  %1416 = vst [vmem:[%s1386 + $0xe0] sm:$0xff] %v1415
                  %v1417 = vld [vmem:[%s1385 + $0x78] sm:$0xff]
                  %1418 = vst [vmem:[%s1386 + $0xf0] sm:$0xff] %v1417
                  %v1419 = vld [vmem:[%s1385 + $0x80] sm:$0xff]
                  %1420 = vst [vmem:[%s1386 + $0x100] sm:$0xff] %v1419
                  %v1421 = vld [vmem:[%s1385 + $0x88] sm:$0xff]
                  %1422 = vst [vmem:[%s1386 + $0x110] sm:$0xff] %v1421
                  %v1423 = vld [vmem:[%s1385 + $0x90] sm:$0xff]
                  %1424 = vst [vmem:[%s1386 + $0x120] sm:$0xff] %v1423
                  %v1425 = vld [vmem:[%s1385 + $0x98] sm:$0xff]
                  %1426 = vst [vmem:[%s1386 + $0x130] sm:$0xff] %v1425
                  %v1427 = vld [vmem:[%s1385 + $0xa0] sm:$0xff]
                  %1428 = vst [vmem:[%s1386 + $0x140] sm:$0xff] %v1427
                  %v1429 = vld [vmem:[%s1385 + $0xa8] sm:$0xff]
                  %1430 = vst [vmem:[%s1386 + $0x150] sm:$0xff] %v1429
                  %v1431 = vld [vmem:[%s1385 + $0xb0] sm:$0xff]
                  %1432 = vst [vmem:[%s1386 + $0x160] sm:$0xff] %v1431
                  %v1433 = vld [vmem:[%s1385 + $0xb8] sm:$0xff]
                  %1434 = vst [vmem:[%s1386 + $0x170] sm:$0xff] %v1433
                  %v1435 = vld [vmem:[%s1385 + $0xc0] sm:$0xff]
                  %1436 = vst [vmem:[%s1386 + $0x180] sm:$0xff] %v1435
                  %v1437 = vld [vmem:[%s1385 + $0xc8] sm:$0xff]
                  %1438 = vst [vmem:[%s1386 + $0x190] sm:$0xff] %v1437
                  %v1439 = vld [vmem:[%s1385 + $0xd0] sm:$0xff]
                  %1440 = vst [vmem:[%s1386 + $0x1a0] sm:$0xff] %v1439
                  %v1441 = vld [vmem:[%s1385 + $0xd8] sm:$0xff]
                  %1442 = vst [vmem:[%s1386 + $0x1b0] sm:$0xff] %v1441
                  %v1443 = vld [vmem:[%s1385 + $0xe0] sm:$0xff]
                  %1444 = vst [vmem:[%s1386 + $0x1c0] sm:$0xff] %v1443
                  %v1445 = vld [vmem:[%s1385 + $0xe8] sm:$0xff]
                  %1446 = vst [vmem:[%s1386 + $0x1d0] sm:$0xff] %v1445
                  %v1447 = vld [vmem:[%s1385 + $0xf0] sm:$0xff]
                  %1448 = vst [vmem:[%s1386 + $0x1e0] sm:$0xff] %v1447
                  %v1449 = vld [vmem:[%s1385 + $0xf8] sm:$0xff]
                  %1450 = vst [vmem:[%s1386 + $0x1f0] sm:$0xff] %v1449
                  %v1451 = vld [vmem:[%s1385 + $0x100] sm:$0xff]
                  %1452 = vst [vmem:[%s1386 + $0x200] sm:$0xff] %v1451
                  %v1453 = vld [vmem:[%s1385 + $0x108] sm:$0xff]
                  %1454 = vst [vmem:[%s1386 + $0x210] sm:$0xff] %v1453
                  %v1455 = vld [vmem:[%s1385 + $0x110] sm:$0xff]
                  %1456 = vst [vmem:[%s1386 + $0x220] sm:$0xff] %v1455
                  %v1457 = vld [vmem:[%s1385 + $0x118] sm:$0xff]
                  %1458 = vst [vmem:[%s1386 + $0x230] sm:$0xff] %v1457
                  %v1459 = vld [vmem:[%s1385 + $0x120] sm:$0xff]
                  %1460 = vst [vmem:[%s1386 + $0x240] sm:$0xff] %v1459
                  %v1461 = vld [vmem:[%s1385 + $0x128] sm:$0xff]
                  %1462 = vst [vmem:[%s1386 + $0x250] sm:$0xff] %v1461
                $region121: #{dense_block_apply.1} parent=115 // loop_footer
                  %s1384 = sadd.s32 1, %s1380
                $region122: #{dense_block_apply.1} parent=115 // loop_footer_branch
                  %1379 = sbr.rel target = $region118
                $region123: #{dense_block_apply.1} parent=115 // loop_exit
                  _
              $region116: #{dense_block_apply.1} parent=100 // pred_fallthru
                _
              // Predicated region
              $region124: #{dense_block_apply.1} parent=100 // pred_check
                _
              $region125: #{dense_block_apply.1} parent=100 // pred_check_branch
                %1464 = sbr.rel target = $region127
              $region126: #{dense_block_apply.1} parent=100 // pred_region
                _
              $region127: #{dense_block_apply.1} parent=100 // pred_fallthru
                _
            $region101: #{dense_block_apply.1} parent=96 // pred_fallthru
              _
            // Predicated region
            $region102: #{dense_block_apply.1} parent=96 // pred_check
              _
            $region103: #{dense_block_apply.1} parent=96 // pred_check_branch
              %1290 = sbr.rel target = $region105
            $region104: #{dense_block_apply.1} parent=96 // pred_region
              %s1292 = ssub.s32 256, 1
              loop: start=0, step=1, limit=1
              $region106: #{dense_block_apply.1} parent=104 // loop_pre_header
                _
              $region107: #{dense_block_apply.1} parent=104 // loop_header
                %s1294 = sphi 0, %s1298
                %p1295 = scmp.ge.s32.totalorder %s1294, 1
                %s1299 = sphi %s1276, %s1276
                %s1300 = sphi %s1284, %s1284
              $region108: #{dense_block_apply.1} parent=104 // loop_header_branch
                %1297 = sbr.rel (%p1295) target = $region112
              $region109: #{dense_block_apply.1} parent=104 // loop_body
                %v1301 = vld [vmem:[%s1299] sm:%s1292]
                %1302 = vst [vmem:[%s1300] sm:%s1292] %v1301
                %v1303 = vld [vmem:[%s1299 + $0x8] sm:%s1292]
                %1304 = vst [vmem:[%s1300 + $0x10] sm:%s1292] %v1303
                %v1305 = vld [vmem:[%s1299 + $0x10] sm:%s1292]
                %1306 = vst [vmem:[%s1300 + $0x20] sm:%s1292] %v1305
                %v1307 = vld [vmem:[%s1299 + $0x18] sm:%s1292]
                %1308 = vst [vmem:[%s1300 + $0x30] sm:%s1292] %v1307
                %v1309 = vld [vmem:[%s1299 + $0x20] sm:%s1292]
                %1310 = vst [vmem:[%s1300 + $0x40] sm:%s1292] %v1309
                %v1311 = vld [vmem:[%s1299 + $0x28] sm:%s1292]
                %1312 = vst [vmem:[%s1300 + $0x50] sm:%s1292] %v1311
                %v1313 = vld [vmem:[%s1299 + $0x30] sm:%s1292]
                %1314 = vst [vmem:[%s1300 + $0x60] sm:%s1292] %v1313
                %v1315 = vld [vmem:[%s1299 + $0x38] sm:%s1292]
                %1316 = vst [vmem:[%s1300 + $0x70] sm:%s1292] %v1315
                %v1317 = vld [vmem:[%s1299 + $0x40] sm:%s1292]
                %1318 = vst [vmem:[%s1300 + $0x80] sm:%s1292] %v1317
                %v1319 = vld [vmem:[%s1299 + $0x48] sm:%s1292]
                %1320 = vst [vmem:[%s1300 + $0x90] sm:%s1292] %v1319
                %v1321 = vld [vmem:[%s1299 + $0x50] sm:%s1292]
                %1322 = vst [vmem:[%s1300 + $0xa0] sm:%s1292] %v1321
                %v1323 = vld [vmem:[%s1299 + $0x58] sm:%s1292]
                %1324 = vst [vmem:[%s1300 + $0xb0] sm:%s1292] %v1323
                %v1325 = vld [vmem:[%s1299 + $0x60] sm:%s1292]
                %1326 = vst [vmem:[%s1300 + $0xc0] sm:%s1292] %v1325
                %v1327 = vld [vmem:[%s1299 + $0x68] sm:%s1292]
                %1328 = vst [vmem:[%s1300 + $0xd0] sm:%s1292] %v1327
                %v1329 = vld [vmem:[%s1299 + $0x70] sm:%s1292]
                %1330 = vst [vmem:[%s1300 + $0xe0] sm:%s1292] %v1329
                %v1331 = vld [vmem:[%s1299 + $0x78] sm:%s1292]
                %1332 = vst [vmem:[%s1300 + $0xf0] sm:%s1292] %v1331
                %v1333 = vld [vmem:[%s1299 + $0x80] sm:%s1292]
                %1334 = vst [vmem:[%s1300 + $0x100] sm:%s1292] %v1333
                %v1335 = vld [vmem:[%s1299 + $0x88] sm:%s1292]
                %1336 = vst [vmem:[%s1300 + $0x110] sm:%s1292] %v1335
                %v1337 = vld [vmem:[%s1299 + $0x90] sm:%s1292]
                %1338 = vst [vmem:[%s1300 + $0x120] sm:%s1292] %v1337
                %v1339 = vld [vmem:[%s1299 + $0x98] sm:%s1292]
                %1340 = vst [vmem:[%s1300 + $0x130] sm:%s1292] %v1339
                %v1341 = vld [vmem:[%s1299 + $0xa0] sm:%s1292]
                %1342 = vst [vmem:[%s1300 + $0x140] sm:%s1292] %v1341
                %v1343 = vld [vmem:[%s1299 + $0xa8] sm:%s1292]
                %1344 = vst [vmem:[%s1300 + $0x150] sm:%s1292] %v1343
                %v1345 = vld [vmem:[%s1299 + $0xb0] sm:%s1292]
                %1346 = vst [vmem:[%s1300 + $0x160] sm:%s1292] %v1345
                %v1347 = vld [vmem:[%s1299 + $0xb8] sm:%s1292]
                %1348 = vst [vmem:[%s1300 + $0x170] sm:%s1292] %v1347
                %v1349 = vld [vmem:[%s1299 + $0xc0] sm:%s1292]
                %1350 = vst [vmem:[%s1300 + $0x180] sm:%s1292] %v1349
                %v1351 = vld [vmem:[%s1299 + $0xc8] sm:%s1292]
                %1352 = vst [vmem:[%s1300 + $0x190] sm:%s1292] %v1351
                %v1353 = vld [vmem:[%s1299 + $0xd0] sm:%s1292]
                %1354 = vst [vmem:[%s1300 + $0x1a0] sm:%s1292] %v1353
                %v1355 = vld [vmem:[%s1299 + $0xd8] sm:%s1292]
                %1356 = vst [vmem:[%s1300 + $0x1b0] sm:%s1292] %v1355
                %v1357 = vld [vmem:[%s1299 + $0xe0] sm:%s1292]
                %1358 = vst [vmem:[%s1300 + $0x1c0] sm:%s1292] %v1357
                %v1359 = vld [vmem:[%s1299 + $0xe8] sm:%s1292]
                %1360 = vst [vmem:[%s1300 + $0x1d0] sm:%s1292] %v1359
                %v1361 = vld [vmem:[%s1299 + $0xf0] sm:%s1292]
                %1362 = vst [vmem:[%s1300 + $0x1e0] sm:%s1292] %v1361
                %v1363 = vld [vmem:[%s1299 + $0xf8] sm:%s1292]
                %1364 = vst [vmem:[%s1300 + $0x1f0] sm:%s1292] %v1363
                %v1365 = vld [vmem:[%s1299 + $0x100] sm:%s1292]
                %1366 = vst [vmem:[%s1300 + $0x200] sm:%s1292] %v1365
                %v1367 = vld [vmem:[%s1299 + $0x108] sm:%s1292]
                %1368 = vst [vmem:[%s1300 + $0x210] sm:%s1292] %v1367
                %v1369 = vld [vmem:[%s1299 + $0x110] sm:%s1292]
                %1370 = vst [vmem:[%s1300 + $0x220] sm:%s1292] %v1369
                %v1371 = vld [vmem:[%s1299 + $0x118] sm:%s1292]
                %1372 = vst [vmem:[%s1300 + $0x230] sm:%s1292] %v1371
                %v1373 = vld [vmem:[%s1299 + $0x120] sm:%s1292]
                %1374 = vst [vmem:[%s1300 + $0x240] sm:%s1292] %v1373
                %v1375 = vld [vmem:[%s1299 + $0x128] sm:%s1292]
                %1376 = vst [vmem:[%s1300 + $0x250] sm:%s1292] %v1375
              $region110: #{dense_block_apply.1} parent=104 // loop_footer
                %s1298 = sadd.s32 1, %s1294
              $region111: #{dense_block_apply.1} parent=104 // loop_footer_branch
                %1293 = sbr.rel target = $region107
              $region112: #{dense_block_apply.1} parent=104 // loop_exit
                _
            $region105: #{dense_block_apply.1} parent=96 // pred_fallthru
              _
          $region97: #{dense_block_apply.1} parent=92 // pred_fallthru
            _
          %1465 = vnop
        $region93: #{dense_block_apply.1} parent=76 // pred_fallthru
          _
      $region77: #{dense_block_apply.1} parent=5 // pred_fallthru
        _
      %p1466 = scmp.le.s32.totalorder 2, %s11
      // Predicated region
      $region128: #{dense_block_apply.1} parent=5 // pred_check
        %p1467 = pneg %p1466
      $region129: #{dense_block_apply.1} parent=5 // pred_check_branch
        %1469 = sbr.rel (%p1467) target = $region131
      $region130: #{dense_block_apply.1} parent=5 // pred_region
        %s1470 = ssub.s32 %s11, 2
        // Predicated region
        $region132: #{dense_block_apply.1} parent=130 // pred_check
          %p1471 = pneg %p195
        $region133: #{dense_block_apply.1} parent=130 // pred_check_branch
          %1473 = sbr.rel (%p1471) target = $region135
        $region134: #{dense_block_apply.1} parent=130 // pred_region
          %s1474 = sand.u32 %s180, 1
          %s1475 = sand.u32 %s180, 1
          %s1476 = smul.addr %s1475, 304
          %s1477 = scalar_lea.vmem [#allocation4], %s1476
        $region135: #{dense_block_apply.1} parent=130 // pred_fallthru
          _
      $region131: #{dense_block_apply.1} parent=5 // pred_fallthru
        _
    $region6: #{dense_block_apply.1} parent=1 // loop_footer
      %s15 = sadd.s32 1, %s11
    $region7: #{dense_block_apply.1} parent=1 // loop_footer_branch
      %10 = sbr.rel target = $region3
    $region8: #{dense_block_apply.1} parent=1 // loop_exit
      _

</llo_original>
